<compile_context>
chip_gen: v5e
topology: v5e:2x2
jax: 0.10.0
libtpu: 0.0.40
codegen_flags: <defaults>
</compile_context>

<pallas_src>
import math

import jax
import jax.numpy as jnp
import numpy as np
from jax.experimental import pallas as pl
from jax.experimental.pallas import tpu as pltpu

# Small, forward-consistent shapes: x_dim=16, h_dim=32, z_dim=8, y_dim(LEN)=4
B, X_DIM, H_DIM, Z_DIM, LEN = 8, 16, 32, 8, 4
OUT_W = 128   # lane-dense output slab width (3*Z + LEN = 28 meaningful lanes)


# ---------------------------------------------------------------------------
# Kernel
# ---------------------------------------------------------------------------
def encoder_kernel(x_ref, w_ref, b_ref, eps_ref, out_ref):
    f32 = jnp.float32
    H, Z, L = H_DIM, Z_DIM, LEN
    x = x_ref[...]                    # [B, H] (features in cols 0:X, zero padded)
    Bsz = x.shape[0]
    bg = b_ref[L]                     # [8, 128] global-bias rows

    # ---- one MXU dot for every x-side projection, hoisted out of the loop ----
    # chunk 0: [firstcell densy (0:H) | GRU step 0 W_ih (H:H+3H)]
    # chunk i>0: GRU step i W_ih in cols 0:3H of that 128-lane chunk
    gx_all = jnp.dot(x, w_ref[:, 0:128 * L], preferred_element_type=f32)  # [B, 512]

    # ---- per-step noise contribution to the fused z-side matmul (off-path) ----
    #   z = mu_h + std*eps   =>   z @ Wz = mu_h @ Wz + (std*eps) @ Wz
    std_fixed = jnp.exp(f32(0.5 * 0.005))   # sigma = 0.005 used as log-var (std ~ 1.0025)
    noise = [std_fixed * eps_ref[i] for i in range(L)]                    # [B, H]
    eps_w = [jnp.dot(noise[i], w_ref[:, 128 * (L + i):128 * (L + i + 1)],
                     preferred_element_type=f32) for i in range(L)]       # [B, 128]

    # ---- firstcell Predict: keep only the pre-sigmoid logit on the path ----
    # threshold uses logit >= 0 (exactly sigmoid(logit) >= 0.5); sigmoid for the
    # stored t column is deferred and batched after the loop.
    h1 = jax.nn.relu(gx_all[:, 0:H] + bg[0:1, 0:H])
    t_logits = [jnp.sum(h1 * bg[1:2, 0:H], axis=1, keepdims=True) + bg[2:3, 0:1]]

    z = jnp.zeros((Bsz, H), f32)
    zwh = jnp.zeros((Bsz, 3 * H), f32)        # z @ W_hh for step 0 (z == 0)
    latent = mu = log_var = None

    # ---- recurrence over LEN steps (statically unrolled; LEN is small) ----
    for i in range(L):
        bs = b_ref[i]                                        # [8, 128] per-step rows
        tmp_t = (t_logits[i] >= 0.0).astype(f32)             # [B, 1], no sigmoid on path
        off = H if i == 0 else 128 * i                       # step 0 shares chunk 0
        # PyTorch GRUCell with input cat([x, tmp_t]); gate order (r, z, n)
        gi = (gx_all[:, off:off + 3 * H]
              + tmp_t * bs[0:1, 0:3 * H]                     # W_ih row for tmp_t
              + bs[1:2, 0:3 * H])                            # b_ih
        gh = zwh + bs[2:3, 0:3 * H]                          # z @ W_hh + b_hh
        s = gi + gh
        rz = jax.nn.sigmoid(s[:, 0:2 * H])                   # r and z gates, one EUP pass
        r, zg = rz[:, 0:H], rz[:, H:2 * H]
        n = jnp.tanh(gi[:, 2 * H:3 * H] + r * gh[:, 2 * H:3 * H])
        mu_h = (1.0 - zg) * n + zg * z                       # GRUCell output

        # single fused z-side matmul per step, driven by mu_h (noise pre-folded):
        #   cols [0:3H)   -> next step's W_hh          (i < L-1)
        #   cols [3H:4H)  -> Predict.densy weights     (i < L-1)
        #   cols [0:2Z)   -> GaussianSample mu|log_var (i == L-1)
        zw = jnp.dot(mu_h, w_ref[:, 128 * (L + i):128 * (L + i + 1)],
                     preferred_element_type=f32) + eps_w[i]  # [B, 128]
        z = mu_h + noise[i]                                  # in parallel with the matmul

        if i < L - 1:
            zwh = zw[:, 0:3 * H]
            ph = jax.nn.relu(zw[:, 3 * H:4 * H] + bs[3:4, 0:H])
            t_logits.append(jnp.sum(ph * bs[4:5, 0:H], axis=1, keepdims=True)
                            + bs[5:6, 0:1])                  # pre-sigmoid logit only
        else:
            # ---- GaussianSample(h_dim, z_dim) ----
            mu = zw[:, 0:Z] + bg[3:4, 0:Z]
            log_var = jax.nn.softplus(zw[:, Z:2 * Z] + bg[4:5, 0:Z])
            latent = mu + jnp.exp(0.5 * log_var) * eps_ref[L][:, 0:Z]

    # ---- batched sigmoid on the L t-logits (off the recurrence) ----
    # place each [B,1] logit at its lane with a one-hot mask (pure VPU)
    lane = jax.lax.broadcasted_iota(jnp.int32, (1, L), 1)
    t_block = t_logits[0] * (lane == 0).astype(f32)
    for i in range(1, L):
        t_block = t_block + t_logits[i] * (lane == i).astype(f32)
    t = jax.nn.sigmoid(t_block)                              # [B, L]

    # ---- ONE lane-dense store of the whole [B, 128] output slab ----
    pad = jnp.zeros((Bsz, OUT_W - (3 * Z + L)), f32)
    out_ref[...] = jnp.concatenate([latent, mu, log_var, t, pad], axis=1)


# ---------------------------------------------------------------------------
# Wrapper
# ---------------------------------------------------------------------------
def encoder_forward(x, packed, eps_seq, eps_lat):
    H, Z, L = H_DIM, Z_DIM, LEN
    Bsz = x.shape[0]
    # pad x to H cols so it matches the K dim of the weight slab (zeros contribute 0)
    x_pad = jnp.pad(x, ((0, 0), (0, H - x.shape[1])))
    # append the latent epsilon (padded to H lanes) to the per-step epsilons
    eps_lat_pad = jnp.pad(eps_lat, ((0, 0), (0, H - eps_lat.shape[1])))
    eps_all = jnp.concatenate([eps_seq, eps_lat_pad[None]], axis=0)     # [L+1, B, H]

    vmem = lambda: pl.BlockSpec(memory_space=pltpu.MemorySpace.VMEM)
    inputs = (x_pad, packed["w"], packed["b"], eps_all)   # 4 input DMAs, 1 output DMA
    # TODO(synk): for throughput, stack many sequences into B (>=128 rows) and add
    # a "parallel" grid axis (dimension_semantics) so v7x's second TensorCore is
    # used; a single grid point is intentional at this demo size (<200 KiB VMEM).
    out = pl.pallas_call(
        encoder_kernel,
        out_shape=jax.ShapeDtypeStruct((Bsz, OUT_W), jnp.float32),
        in_specs=[vmem() for _ in inputs],
        out_specs=vmem(),
    )(*inputs)
    return (out[:, 0:Z], out[:, Z:2 * Z], out[:, 2 * Z:3 * Z],
            out[:, 3 * Z:3 * Z + L])


# ---------------------------------------------------------------------------
# Parameter init (torch-style layouts) and packing into kernel slabs
# ---------------------------------------------------------------------------
def init_params(key):
    keys = iter(jax.random.split(key, 32))

    def unif(shape, fan_in):
        b = 1.0 / math.sqrt(fan_in)
        return jax.random.uniform(next(keys), shape, jnp.float32, -b, b)

    p = {}
    p["fc_w1"] = unif((X_DIM, H_DIM), X_DIM)
    p["fc_b1"] = unif((1, H_DIM), X_DIM)
    p["fc_w2"] = unif((1, H_DIM), H_DIM)            # Linear(h_dim, 1) weight, torch layout
    p["fc_b2"] = unif((1, 1), H_DIM)
    p["gru_wx"] = unif((LEN, X_DIM, 3 * H_DIM), H_DIM)
    p["gru_wt"] = unif((LEN, 1, 3 * H_DIM), H_DIM)  # weight row for the thresholded feature
    p["gru_wh"] = unif((LEN, H_DIM, 3 * H_DIM), H_DIM)
    p["gru_bi"] = unif((LEN, 1, 3 * H_DIM), H_DIM)
    p["gru_bh"] = unif((LEN, 1, 3 * H_DIM), H_DIM)
    p["pr_w1"] = unif((LEN, H_DIM, H_DIM), H_DIM)
    p["pr_b1"] = unif((LEN, 1, H_DIM), H_DIM)
    p["pr_w2"] = unif((LEN, 1, H_DIM), H_DIM)
    p["pr_b2"] = unif((LEN, 1, 1), H_DIM)
    p["smu_w"] = unif((H_DIM, Z_DIM), H_DIM)
    p["smu_b"] = unif((1, Z_DIM), H_DIM)
    p["slv_w"] = unif((H_DIM, Z_DIM), H_DIM)
    p["slv_b"] = unif((1, Z_DIM), H_DIM)
    return p


def pack_params(p):
    """Pack the torch-layout params into 2 lane-aligned slabs for the kernel."""
    H, X, Z, L = H_DIM, X_DIM, Z_DIM, LEN

    # weight slab [H, 128*2L] (x-side chunks 0..L-1 use rows 0:X, rest zero):
    #   chunk 0:  cols 0:H     -> firstcell densy
    #             cols H:H+3H  -> GRU step 0 input projection
    #   chunk i:  cols 0:3H    -> GRU step i input projection          (i=1..L-1)
    #   chunk L+i (z-side fused): [gru_wh[i+1] | pr_w1[i]]; last = [smu_w | slv_w]
    w = jnp.zeros((H, 128 * 2 * L), jnp.float32)
    w = w.at[0:X, 0:H].set(p["fc_w1"])
    w = w.at[0:X, H:H + 3 * H].set(p["gru_wx"][0])
    for i in range(1, L):
        w = w.at[0:X, 128 * i:128 * i + 3 * H].set(p["gru_wx"][i])
    for i in range(L - 1):
        base = 128 * (L + i)
        w = w.at[:, base:base + 3 * H].set(p["gru_wh"][i + 1])
        w = w.at[:, base + 3 * H:base + 4 * H].set(p["pr_w1"][i])
    base = 128 * (2 * L - 1)
    w = w.at[:, base:base + Z].set(p["smu_w"])
    w = w.at[:, base + Z:base + 2 * Z].set(p["slv_w"])

    # bias slab [(L+1), 8, 128]:
    #   slot i<L rows: wt, b_ih, b_hh, pr_b1, pr_w2, pr_b2
    #   slot L  rows: fc_b1, fc_w2, fc_b2, smu_b, slv_b
    b = jnp.zeros((L + 1, 8, 128), jnp.float32)
    for i in range(L):
        b = b.at[i, 0, 0:3 * H].set(p["gru_wt"][i, 0])
        b = b.at[i, 1, 0:3 * H].set(p["gru_bi"][i, 0])
        b = b.at[i, 2, 0:3 * H].set(p["gru_bh"][i, 0])
        b = b.at[i, 3, 0:H].set(p["pr_b1"][i, 0])
        b = b.at[i, 4, 0:H].set(p["pr_w2"][i, 0])
        b = b.at[i, 5, 0:1].set(p["pr_b2"][i, 0])
    b = b.at[L, 0, 0:H].set(p["fc_b1"][0])
    b = b.at[L, 1, 0:H].set(p["fc_w2"][0])
    b = b.at[L, 2, 0:1].set(p["fc_b2"][0])
    b = b.at[L, 3, 0:Z].set(p["smu_b"][0])
    b = b.at[L, 4, 0:Z].set(p["slv_b"][0])

    return dict(w=w, b=b)


# ---------------------------------------------------------------------------
# Pure-JAX reference (mirrors the PyTorch forward exactly, unpacked params)
# ---------------------------------------------------------------------------
def encoder_reference(x, p, eps_seq, eps_lat):
    hi = jax.lax.Precision.HIGHEST
    relu, sig = jax.nn.relu, jax.nn.sigmoid
    H = H_DIM
    h1 = relu(jnp.dot(x, p["fc_w1"], precision=hi) + p["fc_b1"])
    t_cols = [sig(jnp.sum(h1 * p["fc_w2"], axis=1, keepdims=True) + p["fc_b2"])]
    z = jnp.zeros((x.shape[0], H), jnp.float32)
    std_fixed = jnp.exp(jnp.float32(0.5 * 0.005))
    for i in range(LEN):
        tmp_t = (t_cols[i] >= 0.5).astype(jnp.float32)
        gi = jnp.dot(x, p["gru_wx"][i], precision=hi) + tmp_t * p["gru_wt"][i] + p["gru_bi"][i]
        gh = jnp.dot(z, p["gru_wh"][i], precision=hi) + p["gru_bh"][i]
        r = sig(gi[:, 0:H] + gh[:, 0:H])
        zg = sig(gi[:, H:2 * H] + gh[:, H:2 * H])
        n = jnp.tanh(gi[:, 2 * H:3 * H] + r * gh[:, 2 * H:3 * H])
        mu_h = (1.0 - zg) * n + zg * z
        z = mu_h + std_fixed * eps_seq[i]
        if i < LEN - 1:
            ph = relu(jnp.dot(z, p["pr_w1"][i], precision=hi) + p["pr_b1"][i])
            t_cols.append(sig(jnp.sum(ph * p["pr_w2"][i], axis=1, keepdims=True) + p["pr_b2"][i]))
    mu = jnp.dot(z, p["smu_w"], precision=hi) + p["smu_b"]
    log_var = jax.nn.softplus(jnp.dot(z, p["slv_w"], precision=hi) + p["slv_b"])
    latent = mu + jnp.exp(0.5 * log_var) * eps_lat
    return latent, mu, log_var, jnp.concatenate(t_cols, axis=1)


if __name__ == "__main__":
    key = jax.random.PRNGKey(0)
    kx, kp, ke1, ke2 = jax.random.split(key, 4)
    x = jax.random.normal(kx, (B, X_DIM), jnp.float32)
    params = init_params(kp)
    packed = pack_params(params)
    eps_seq = jax.random.normal(ke1, (LEN, B, H_DIM), jnp.float32)   # per-step GRU epsilons
    eps_lat = jax.random.normal(ke2, (B, Z_DIM), jnp.float32)        # GaussianSample epsilon

    outs = jax.block_until_ready(encoder_forward(x, packed, eps_seq, eps_lat))
    refs = encoder_reference(x, params, eps_seq, eps_lat)
    for name, o, r in zip(("latent", "mu", "log_var", "t"), outs, refs):
        np.testing.assert_allclose(np.asarray(o), np.asarray(r), rtol=2e-3, atol=2e-3,
                                   err_msg=f"mismatch in {name}")
    print("KERNEL_OK")
</pallas_src>

<mosaic_0001>
module attributes {stable_mosaic.version = 11 : i64} {
  func.func @encoder_kernel(%arg0: memref<8x32xf32, #tpu.memory_space<vmem>>, %arg1: memref<32x1024xf32, #tpu.memory_space<vmem>>, %arg2: memref<5x8x128xf32, #tpu.memory_space<vmem>>, %arg3: memref<5x8x32xf32, #tpu.memory_space<vmem>>, %arg4: memref<8x128xf32, #tpu.memory_space<vmem>>) attributes {dimension_semantics = [], scalar_prefetch = 0 : i64, scratch_operands = 0 : i64, tpu.core_type = #tpu.core_type<tc>} {
    %c0 = arith.constant 0 : index
    %c0_0 = arith.constant 0 : index
    %0 = vector.load %arg0[%c0, %c0_0] : memref<8x32xf32, #tpu.memory_space<vmem>>, vector<8x32xf32>
    %c4 = arith.constant 4 : index
    %c0_1 = arith.constant 0 : index
    %c0_2 = arith.constant 0 : index
    %1 = vector.load %arg2[%c4, %c0_1, %c0_2] : memref<5x8x128xf32, #tpu.memory_space<vmem>>, vector<1x8x128xf32>
    %2 = vector.shape_cast %1 : vector<1x8x128xf32> to vector<8x128xf32>
    %c0_3 = arith.constant 0 : index
    %c0_4 = arith.constant 0 : index
    %3 = vector.load %arg1[%c0_3, %c0_4] : memref<32x1024xf32, #tpu.memory_space<vmem>>, vector<32x512xf32>
    %cst = arith.constant dense<0.000000e+00> : vector<8x512xf32>
    %4 = tpu.matmul %0, %3, %cst {dimension_numbers = #tpu.dot_dimension_numbers<[1], [0], [0], [1], [0, 0, 1, 1], [], []>} : vector<8x32xf32>, vector<32x512xf32>, vector<8x512xf32> -> vector<8x512xf32>
    %cst_5 = arith.constant 2.500000e-03 : f32
    %5 = math.exp %cst_5 : f32
    %c0_6 = arith.constant 0 : index
    %c0_7 = arith.constant 0 : index
    %c0_8 = arith.constant 0 : index
    %6 = vector.load %arg3[%c0_6, %c0_7, %c0_8] : memref<5x8x32xf32, #tpu.memory_space<vmem>>, vector<1x8x32xf32>
    %7 = vector.shape_cast %6 : vector<1x8x32xf32> to vector<8x32xf32>
    %8 = vector.broadcast %5 : f32 to vector<8x32xf32>
    %9 = arith.mulf %8, %7 : vector<8x32xf32>
    %c1 = arith.constant 1 : index
    %c0_9 = arith.constant 0 : index
    %c0_10 = arith.constant 0 : index
    %10 = vector.load %arg3[%c1, %c0_9, %c0_10] : memref<5x8x32xf32, #tpu.memory_space<vmem>>, vector<1x8x32xf32>
    %11 = vector.shape_cast %10 : vector<1x8x32xf32> to vector<8x32xf32>
    %12 = vector.broadcast %5 : f32 to vector<8x32xf32>
    %13 = arith.mulf %12, %11 : vector<8x32xf32>
    %c2 = arith.constant 2 : index
    %c0_11 = arith.constant 0 : index
    %c0_12 = arith.constant 0 : index
    %14 = vector.load %arg3[%c2, %c0_11, %c0_12] : memref<5x8x32xf32, #tpu.memory_space<vmem>>, vector<1x8x32xf32>
    %15 = vector.shape_cast %14 : vector<1x8x32xf32> to vector<8x32xf32>
    %16 = vector.broadcast %5 : f32 to vector<8x32xf32>
    %17 = arith.mulf %16, %15 : vector<8x32xf32>
    %c3 = arith.constant 3 : index
    %c0_13 = arith.constant 0 : index
    %c0_14 = arith.constant 0 : index
    %18 = vector.load %arg3[%c3, %c0_13, %c0_14] : memref<5x8x32xf32, #tpu.memory_space<vmem>>, vector<1x8x32xf32>
    %19 = vector.shape_cast %18 : vector<1x8x32xf32> to vector<8x32xf32>
    %20 = vector.broadcast %5 : f32 to vector<8x32xf32>
    %21 = arith.mulf %20, %19 : vector<8x32xf32>
    %c0_15 = arith.constant 0 : index
    %c512 = arith.constant 512 : index
    %22 = vector.load %arg1[%c0_15, %c512] : memref<32x1024xf32, #tpu.memory_space<vmem>>, vector<32x128xf32>
    %cst_16 = arith.constant dense<0.000000e+00> : vector<8x128xf32>
    %23 = tpu.matmul %9, %22, %cst_16 {dimension_numbers = #tpu.dot_dimension_numbers<[1], [0], [0], [1], [0, 0, 1, 1], [], []>} : vector<8x32xf32>, vector<32x128xf32>, vector<8x128xf32> -> vector<8x128xf32>
    %c0_17 = arith.constant 0 : index
    %c640 = arith.constant 640 : index
    %24 = vector.load %arg1[%c0_17, %c640] : memref<32x1024xf32, #tpu.memory_space<vmem>>, vector<32x128xf32>
    %cst_18 = arith.constant dense<0.000000e+00> : vector<8x128xf32>
    %25 = tpu.matmul %13, %24, %cst_18 {dimension_numbers = #tpu.dot_dimension_numbers<[1], [0], [0], [1], [0, 0, 1, 1], [], []>} : vector<8x32xf32>, vector<32x128xf32>, vector<8x128xf32> -> vector<8x128xf32>
    %c0_19 = arith.constant 0 : index
    %c768 = arith.constant 768 : index
    %26 = vector.load %arg1[%c0_19, %c768] : memref<32x1024xf32, #tpu.memory_space<vmem>>, vector<32x128xf32>
    %cst_20 = arith.constant dense<0.000000e+00> : vector<8x128xf32>
    %27 = tpu.matmul %17, %26, %cst_20 {dimension_numbers = #tpu.dot_dimension_numbers<[1], [0], [0], [1], [0, 0, 1, 1], [], []>} : vector<8x32xf32>, vector<32x128xf32>, vector<8x128xf32> -> vector<8x128xf32>
    %c0_21 = arith.constant 0 : index
    %c896 = arith.constant 896 : index
    %28 = vector.load %arg1[%c0_21, %c896] : memref<32x1024xf32, #tpu.memory_space<vmem>>, vector<32x128xf32>
    %cst_22 = arith.constant dense<0.000000e+00> : vector<8x128xf32>
    %29 = tpu.matmul %21, %28, %cst_22 {dimension_numbers = #tpu.dot_dimension_numbers<[1], [0], [0], [1], [0, 0, 1, 1], [], []>} : vector<8x32xf32>, vector<32x128xf32>, vector<8x128xf32> -> vector<8x128xf32>
    %30 = vector.extract_strided_slice %4 {offsets = [0, 0], sizes = [8, 32], strides = [1, 1]} : vector<8x512xf32> to vector<8x32xf32>
    %31 = vector.extract_strided_slice %2 {offsets = [0, 0], sizes = [1, 32], strides = [1, 1]} : vector<8x128xf32> to vector<1x32xf32>
    %32 = vector.broadcast %31 : vector<1x32xf32> to vector<8x32xf32>
    %33 = arith.addf %30, %32 : vector<8x32xf32>
    %cst_23 = arith.constant 0.000000e+00 : f32
    %34 = vector.broadcast %cst_23 : f32 to vector<8x32xf32>
    %35 = arith.maximumf %33, %34 : vector<8x32xf32>
    %36 = vector.extract_strided_slice %2 {offsets = [1, 0], sizes = [1, 32], strides = [1, 1]} : vector<8x128xf32> to vector<1x32xf32>
    %37 = vector.broadcast %36 : vector<1x32xf32> to vector<8x32xf32>
    %38 = arith.mulf %35, %37 : vector<8x32xf32>
    %cst_24 = arith.constant dense<0.000000e+00> : vector<8xf32>
    %39 = vector.multi_reduction <add>, %38, %cst_24 [1] : vector<8x32xf32> to vector<8xf32>
    %40 = vector.shape_cast %39 : vector<8xf32> to vector<8x1xf32>
    %41 = vector.extract_strided_slice %2 {offsets = [2, 0], sizes = [1, 1], strides = [1, 1]} : vector<8x128xf32> to vector<1x1xf32>
    %42 = vector.broadcast %41 : vector<1x1xf32> to vector<8x1xf32>
    %43 = arith.addf %40, %42 : vector<8x1xf32>
    %cst_25 = arith.constant 0.000000e+00 : f32
    %44 = vector.broadcast %cst_25 : f32 to vector<8x32xf32>
    %cst_26 = arith.constant 0.000000e+00 : f32
    %45 = vector.broadcast %cst_26 : f32 to vector<8x96xf32>
    %c0_27 = arith.constant 0 : index
    %c0_28 = arith.constant 0 : index
    %c0_29 = arith.constant 0 : index
    %46 = vector.load %arg2[%c0_27, %c0_28, %c0_29] : memref<5x8x128xf32, #tpu.memory_space<vmem>>, vector<1x8x128xf32>
    %47 = vector.shape_cast %46 : vector<1x8x128xf32> to vector<8x128xf32>
    %cst_30 = arith.constant 0.000000e+00 : f32
    %48 = vector.broadcast %cst_30 : f32 to vector<8x1xf32>
    %49 = arith.cmpf oge, %43, %48 : vector<8x1xf32>
    %50 = arith.extui %49 : vector<8x1xi1> to vector<8x1xi32>
    %51 = arith.sitofp %50 : vector<8x1xi32> to vector<8x1xf32>
    %52 = vector.extract_strided_slice %4 {offsets = [0, 32], sizes = [8, 96], strides = [1, 1]} : vector<8x512xf32> to vector<8x96xf32>
    %53 = vector.extract_strided_slice %47 {offsets = [0, 0], sizes = [1, 96], strides = [1, 1]} : vector<8x128xf32> to vector<1x96xf32>
    %54 = vector.broadcast %51 : vector<8x1xf32> to vector<8x96xf32>
    %55 = vector.broadcast %53 : vector<1x96xf32> to vector<8x96xf32>
    %56 = arith.mulf %54, %55 : vector<8x96xf32>
    %57 = arith.addf %52, %56 : vector<8x96xf32>
    %58 = vector.extract_strided_slice %47 {offsets = [1, 0], sizes = [1, 96], strides = [1, 1]} : vector<8x128xf32> to vector<1x96xf32>
    %59 = vector.broadcast %58 : vector<1x96xf32> to vector<8x96xf32>
    %60 = arith.addf %57, %59 : vector<8x96xf32>
    %61 = vector.extract_strided_slice %47 {offsets = [2, 0], sizes = [1, 96], strides = [1, 1]} : vector<8x128xf32> to vector<1x96xf32>
    %62 = vector.broadcast %61 : vector<1x96xf32> to vector<8x96xf32>
    %63 = arith.addf %45, %62 : vector<8x96xf32>
    %64 = arith.addf %60, %63 : vector<8x96xf32>
    %65 = vector.extract_strided_slice %64 {offsets = [0, 0], sizes = [8, 64], strides = [1, 1]} : vector<8x96xf32> to vector<8x64xf32>
    %66 = arith.negf %65 : vector<8x64xf32>
    %67 = math.exp %66 : vector<8x64xf32>
    %cst_31 = arith.constant 1.000000e+00 : f32
    %68 = vector.broadcast %cst_31 : f32 to vector<8x64xf32>
    %69 = arith.addf %68, %67 : vector<8x64xf32>
    %70 = arith.divf %68, %69 : vector<8x64xf32>
    %71 = vector.extract_strided_slice %70 {offsets = [0, 0], sizes = [8, 32], strides = [1, 1]} : vector<8x64xf32> to vector<8x32xf32>
    %72 = vector.extract_strided_slice %70 {offsets = [0, 32], sizes = [8, 32], strides = [1, 1]} : vector<8x64xf32> to vector<8x32xf32>
    %73 = vector.extract_strided_slice %60 {offsets = [0, 64], sizes = [8, 32], strides = [1, 1]} : vector<8x96xf32> to vector<8x32xf32>
    %74 = vector.extract_strided_slice %63 {offsets = [0, 64], sizes = [8, 32], strides = [1, 1]} : vector<8x96xf32> to vector<8x32xf32>
    %75 = arith.mulf %71, %74 : vector<8x32xf32>
    %76 = arith.addf %73, %75 : vector<8x32xf32>
    %77 = math.tanh %76 : vector<8x32xf32>
    %cst_32 = arith.constant 1.000000e+00 : f32
    %78 = vector.broadcast %cst_32 : f32 to vector<8x32xf32>
    %79 = arith.subf %78, %72 : vector<8x32xf32>
    %80 = arith.mulf %79, %77 : vector<8x32xf32>
    %81 = arith.mulf %72, %44 : vector<8x32xf32>
    %82 = arith.addf %80, %81 : vector<8x32xf32>
    %c0_33 = arith.constant 0 : index
    %c512_34 = arith.constant 512 : index
    %83 = vector.load %arg1[%c0_33, %c512_34] : memref<32x1024xf32, #tpu.memory_space<vmem>>, vector<32x128xf32>
    %cst_35 = arith.constant dense<0.000000e+00> : vector<8x128xf32>
    %84 = tpu.matmul %82, %83, %cst_35 {dimension_numbers = #tpu.dot_dimension_numbers<[1], [0], [0], [1], [0, 0, 1, 1], [], []>} : vector<8x32xf32>, vector<32x128xf32>, vector<8x128xf32> -> vector<8x128xf32>
    %85 = arith.addf %84, %23 : vector<8x128xf32>
    %86 = arith.addf %82, %9 : vector<8x32xf32>
    %87 = vector.extract_strided_slice %85 {offsets = [0, 0], sizes = [8, 96], strides = [1, 1]} : vector<8x128xf32> to vector<8x96xf32>
    %88 = vector.extract_strided_slice %85 {offsets = [0, 96], sizes = [8, 32], strides = [1, 1]} : vector<8x128xf32> to vector<8x32xf32>
    %89 = vector.extract_strided_slice %47 {offsets = [3, 0], sizes = [1, 32], strides = [1, 1]} : vector<8x128xf32> to vector<1x32xf32>
    %90 = vector.broadcast %89 : vector<1x32xf32> to vector<8x32xf32>
    %91 = arith.addf %88, %90 : vector<8x32xf32>
    %cst_36 = arith.constant 0.000000e+00 : f32
    %92 = vector.broadcast %cst_36 : f32 to vector<8x32xf32>
    %93 = arith.maximumf %91, %92 : vector<8x32xf32>
    %94 = vector.extract_strided_slice %47 {offsets = [4, 0], sizes = [1, 32], strides = [1, 1]} : vector<8x128xf32> to vector<1x32xf32>
    %95 = vector.broadcast %94 : vector<1x32xf32> to vector<8x32xf32>
    %96 = arith.mulf %93, %95 : vector<8x32xf32>
    %cst_37 = arith.constant dense<0.000000e+00> : vector<8xf32>
    %97 = vector.multi_reduction <add>, %96, %cst_37 [1] : vector<8x32xf32> to vector<8xf32>
    %98 = vector.shape_cast %97 : vector<8xf32> to vector<8x1xf32>
    %99 = vector.extract_strided_slice %47 {offsets = [5, 0], sizes = [1, 1], strides = [1, 1]} : vector<8x128xf32> to vector<1x1xf32>
    %100 = vector.broadcast %99 : vector<1x1xf32> to vector<8x1xf32>
    %101 = arith.addf %98, %100 : vector<8x1xf32>
    %c1_38 = arith.constant 1 : index
    %c0_39 = arith.constant 0 : index
    %c0_40 = arith.constant 0 : index
    %102 = vector.load %arg2[%c1_38, %c0_39, %c0_40] : memref<5x8x128xf32, #tpu.memory_space<vmem>>, vector<1x8x128xf32>
    %103 = vector.shape_cast %102 : vector<1x8x128xf32> to vector<8x128xf32>
    %cst_41 = arith.constant 0.000000e+00 : f32
    %104 = vector.broadcast %cst_41 : f32 to vector<8x1xf32>
    %105 = arith.cmpf oge, %101, %104 : vector<8x1xf32>
    %106 = arith.extui %105 : vector<8x1xi1> to vector<8x1xi32>
    %107 = arith.sitofp %106 : vector<8x1xi32> to vector<8x1xf32>
    %108 = vector.extract_strided_slice %4 {offsets = [0, 128], sizes = [8, 96], strides = [1, 1]} : vector<8x512xf32> to vector<8x96xf32>
    %109 = vector.extract_strided_slice %103 {offsets = [0, 0], sizes = [1, 96], strides = [1, 1]} : vector<8x128xf32> to vector<1x96xf32>
    %110 = vector.broadcast %107 : vector<8x1xf32> to vector<8x96xf32>
    %111 = vector.broadcast %109 : vector<1x96xf32> to vector<8x96xf32>
    %112 = arith.mulf %110, %111 : vector<8x96xf32>
    %113 = arith.addf %108, %112 : vector<8x96xf32>
    %114 = vector.extract_strided_slice %103 {offsets = [1, 0], sizes = [1, 96], strides = [1, 1]} : vector<8x128xf32> to vector<1x96xf32>
    %115 = vector.broadcast %114 : vector<1x96xf32> to vector<8x96xf32>
    %116 = arith.addf %113, %115 : vector<8x96xf32>
    %117 = vector.extract_strided_slice %103 {offsets = [2, 0], sizes = [1, 96], strides = [1, 1]} : vector<8x128xf32> to vector<1x96xf32>
    %118 = vector.broadcast %117 : vector<1x96xf32> to vector<8x96xf32>
    %119 = arith.addf %87, %118 : vector<8x96xf32>
    %120 = arith.addf %116, %119 : vector<8x96xf32>
    %121 = vector.extract_strided_slice %120 {offsets = [0, 0], sizes = [8, 64], strides = [1, 1]} : vector<8x96xf32> to vector<8x64xf32>
    %122 = arith.negf %121 : vector<8x64xf32>
    %123 = math.exp %122 : vector<8x64xf32>
    %cst_42 = arith.constant 1.000000e+00 : f32
    %124 = vector.broadcast %cst_42 : f32 to vector<8x64xf32>
    %125 = arith.addf %124, %123 : vector<8x64xf32>
    %126 = arith.divf %124, %125 : vector<8x64xf32>
    %127 = vector.extract_strided_slice %126 {offsets = [0, 0], sizes = [8, 32], strides = [1, 1]} : vector<8x64xf32> to vector<8x32xf32>
    %128 = vector.extract_strided_slice %126 {offsets = [0, 32], sizes = [8, 32], strides = [1, 1]} : vector<8x64xf32> to vector<8x32xf32>
    %129 = vector.extract_strided_slice %116 {offsets = [0, 64], sizes = [8, 32], strides = [1, 1]} : vector<8x96xf32> to vector<8x32xf32>
    %130 = vector.extract_strided_slice %119 {offsets = [0, 64], sizes = [8, 32], strides = [1, 1]} : vector<8x96xf32> to vector<8x32xf32>
    %131 = arith.mulf %127, %130 : vector<8x32xf32>
    %132 = arith.addf %129, %131 : vector<8x32xf32>
    %133 = math.tanh %132 : vector<8x32xf32>
    %cst_43 = arith.constant 1.000000e+00 : f32
    %134 = vector.broadcast %cst_43 : f32 to vector<8x32xf32>
    %135 = arith.subf %134, %128 : vector<8x32xf32>
    %136 = arith.mulf %135, %133 : vector<8x32xf32>
    %137 = arith.mulf %128, %86 : vector<8x32xf32>
    %138 = arith.addf %136, %137 : vector<8x32xf32>
    %c0_44 = arith.constant 0 : index
    %c640_45 = arith.constant 640 : index
    %139 = vector.load %arg1[%c0_44, %c640_45] : memref<32x1024xf32, #tpu.memory_space<vmem>>, vector<32x128xf32>
    %cst_46 = arith.constant dense<0.000000e+00> : vector<8x128xf32>
    %140 = tpu.matmul %138, %139, %cst_46 {dimension_numbers = #tpu.dot_dimension_numbers<[1], [0], [0], [1], [0, 0, 1, 1], [], []>} : vector<8x32xf32>, vector<32x128xf32>, vector<8x128xf32> -> vector<8x128xf32>
    %141 = arith.addf %140, %25 : vector<8x128xf32>
    %142 = arith.addf %138, %13 : vector<8x32xf32>
    %143 = vector.extract_strided_slice %141 {offsets = [0, 0], sizes = [8, 96], strides = [1, 1]} : vector<8x128xf32> to vector<8x96xf32>
    %144 = vector.extract_strided_slice %141 {offsets = [0, 96], sizes = [8, 32], strides = [1, 1]} : vector<8x128xf32> to vector<8x32xf32>
    %145 = vector.extract_strided_slice %103 {offsets = [3, 0], sizes = [1, 32], strides = [1, 1]} : vector<8x128xf32> to vector<1x32xf32>
    %146 = vector.broadcast %145 : vector<1x32xf32> to vector<8x32xf32>
    %147 = arith.addf %144, %146 : vector<8x32xf32>
    %cst_47 = arith.constant 0.000000e+00 : f32
    %148 = vector.broadcast %cst_47 : f32 to vector<8x32xf32>
    %149 = arith.maximumf %147, %148 : vector<8x32xf32>
    %150 = vector.extract_strided_slice %103 {offsets = [4, 0], sizes = [1, 32], strides = [1, 1]} : vector<8x128xf32> to vector<1x32xf32>
    %151 = vector.broadcast %150 : vector<1x32xf32> to vector<8x32xf32>
    %152 = arith.mulf %149, %151 : vector<8x32xf32>
    %cst_48 = arith.constant dense<0.000000e+00> : vector<8xf32>
    %153 = vector.multi_reduction <add>, %152, %cst_48 [1] : vector<8x32xf32> to vector<8xf32>
    %154 = vector.shape_cast %153 : vector<8xf32> to vector<8x1xf32>
    %155 = vector.extract_strided_slice %103 {offsets = [5, 0], sizes = [1, 1], strides = [1, 1]} : vector<8x128xf32> to vector<1x1xf32>
    %156 = vector.broadcast %155 : vector<1x1xf32> to vector<8x1xf32>
    %157 = arith.addf %154, %156 : vector<8x1xf32>
    %c2_49 = arith.constant 2 : index
    %c0_50 = arith.constant 0 : index
    %c0_51 = arith.constant 0 : index
    %158 = vector.load %arg2[%c2_49, %c0_50, %c0_51] : memref<5x8x128xf32, #tpu.memory_space<vmem>>, vector<1x8x128xf32>
    %159 = vector.shape_cast %158 : vector<1x8x128xf32> to vector<8x128xf32>
    %cst_52 = arith.constant 0.000000e+00 : f32
    %160 = vector.broadcast %cst_52 : f32 to vector<8x1xf32>
    %161 = arith.cmpf oge, %157, %160 : vector<8x1xf32>
    %162 = arith.extui %161 : vector<8x1xi1> to vector<8x1xi32>
    %163 = arith.sitofp %162 : vector<8x1xi32> to vector<8x1xf32>
    %164 = vector.extract_strided_slice %4 {offsets = [0, 256], sizes = [8, 96], strides = [1, 1]} : vector<8x512xf32> to vector<8x96xf32>
    %165 = vector.extract_strided_slice %159 {offsets = [0, 0], sizes = [1, 96], strides = [1, 1]} : vector<8x128xf32> to vector<1x96xf32>
    %166 = vector.broadcast %163 : vector<8x1xf32> to vector<8x96xf32>
    %167 = vector.broadcast %165 : vector<1x96xf32> to vector<8x96xf32>
    %168 = arith.mulf %166, %167 : vector<8x96xf32>
    %169 = arith.addf %164, %168 : vector<8x96xf32>
    %170 = vector.extract_strided_slice %159 {offsets = [1, 0], sizes = [1, 96], strides = [1, 1]} : vector<8x128xf32> to vector<1x96xf32>
    %171 = vector.broadcast %170 : vector<1x96xf32> to vector<8x96xf32>
    %172 = arith.addf %169, %171 : vector<8x96xf32>
    %173 = vector.extract_strided_slice %159 {offsets = [2, 0], sizes = [1, 96], strides = [1, 1]} : vector<8x128xf32> to vector<1x96xf32>
    %174 = vector.broadcast %173 : vector<1x96xf32> to vector<8x96xf32>
    %175 = arith.addf %143, %174 : vector<8x96xf32>
    %176 = arith.addf %172, %175 : vector<8x96xf32>
    %177 = vector.extract_strided_slice %176 {offsets = [0, 0], sizes = [8, 64], strides = [1, 1]} : vector<8x96xf32> to vector<8x64xf32>
    %178 = arith.negf %177 : vector<8x64xf32>
    %179 = math.exp %178 : vector<8x64xf32>
    %cst_53 = arith.constant 1.000000e+00 : f32
    %180 = vector.broadcast %cst_53 : f32 to vector<8x64xf32>
    %181 = arith.addf %180, %179 : vector<8x64xf32>
    %182 = arith.divf %180, %181 : vector<8x64xf32>
    %183 = vector.extract_strided_slice %182 {offsets = [0, 0], sizes = [8, 32], strides = [1, 1]} : vector<8x64xf32> to vector<8x32xf32>
    %184 = vector.extract_strided_slice %182 {offsets = [0, 32], sizes = [8, 32], strides = [1, 1]} : vector<8x64xf32> to vector<8x32xf32>
    %185 = vector.extract_strided_slice %172 {offsets = [0, 64], sizes = [8, 32], strides = [1, 1]} : vector<8x96xf32> to vector<8x32xf32>
    %186 = vector.extract_strided_slice %175 {offsets = [0, 64], sizes = [8, 32], strides = [1, 1]} : vector<8x96xf32> to vector<8x32xf32>
    %187 = arith.mulf %183, %186 : vector<8x32xf32>
    %188 = arith.addf %185, %187 : vector<8x32xf32>
    %189 = math.tanh %188 : vector<8x32xf32>
    %cst_54 = arith.constant 1.000000e+00 : f32
    %190 = vector.broadcast %cst_54 : f32 to vector<8x32xf32>
    %191 = arith.subf %190, %184 : vector<8x32xf32>
    %192 = arith.mulf %191, %189 : vector<8x32xf32>
    %193 = arith.mulf %184, %142 : vector<8x32xf32>
    %194 = arith.addf %192, %193 : vector<8x32xf32>
    %c0_55 = arith.constant 0 : index
    %c768_56 = arith.constant 768 : index
    %195 = vector.load %arg1[%c0_55, %c768_56] : memref<32x1024xf32, #tpu.memory_space<vmem>>, vector<32x128xf32>
    %cst_57 = arith.constant dense<0.000000e+00> : vector<8x128xf32>
    %196 = tpu.matmul %194, %195, %cst_57 {dimension_numbers = #tpu.dot_dimension_numbers<[1], [0], [0], [1], [0, 0, 1, 1], [], []>} : vector<8x32xf32>, vector<32x128xf32>, vector<8x128xf32> -> vector<8x128xf32>
    %197 = arith.addf %196, %27 : vector<8x128xf32>
    %198 = arith.addf %194, %17 : vector<8x32xf32>
    %199 = vector.extract_strided_slice %197 {offsets = [0, 0], sizes = [8, 96], strides = [1, 1]} : vector<8x128xf32> to vector<8x96xf32>
    %200 = vector.extract_strided_slice %197 {offsets = [0, 96], sizes = [8, 32], strides = [1, 1]} : vector<8x128xf32> to vector<8x32xf32>
    %201 = vector.extract_strided_slice %159 {offsets = [3, 0], sizes = [1, 32], strides = [1, 1]} : vector<8x128xf32> to vector<1x32xf32>
    %202 = vector.broadcast %201 : vector<1x32xf32> to vector<8x32xf32>
    %203 = arith.addf %200, %202 : vector<8x32xf32>
    %cst_58 = arith.constant 0.000000e+00 : f32
    %204 = vector.broadcast %cst_58 : f32 to vector<8x32xf32>
    %205 = arith.maximumf %203, %204 : vector<8x32xf32>
    %206 = vector.extract_strided_slice %159 {offsets = [4, 0], sizes = [1, 32], strides = [1, 1]} : vector<8x128xf32> to vector<1x32xf32>
    %207 = vector.broadcast %206 : vector<1x32xf32> to vector<8x32xf32>
    %208 = arith.mulf %205, %207 : vector<8x32xf32>
    %cst_59 = arith.constant dense<0.000000e+00> : vector<8xf32>
    %209 = vector.multi_reduction <add>, %208, %cst_59 [1] : vector<8x32xf32> to vector<8xf32>
    %210 = vector.shape_cast %209 : vector<8xf32> to vector<8x1xf32>
    %211 = vector.extract_strided_slice %159 {offsets = [5, 0], sizes = [1, 1], strides = [1, 1]} : vector<8x128xf32> to vector<1x1xf32>
    %212 = vector.broadcast %211 : vector<1x1xf32> to vector<8x1xf32>
    %213 = arith.addf %210, %212 : vector<8x1xf32>
    %c3_60 = arith.constant 3 : index
    %c0_61 = arith.constant 0 : index
    %c0_62 = arith.constant 0 : index
    %214 = vector.load %arg2[%c3_60, %c0_61, %c0_62] : memref<5x8x128xf32, #tpu.memory_space<vmem>>, vector<1x8x128xf32>
    %215 = vector.shape_cast %214 : vector<1x8x128xf32> to vector<8x128xf32>
    %cst_63 = arith.constant 0.000000e+00 : f32
    %216 = vector.broadcast %cst_63 : f32 to vector<8x1xf32>
    %217 = arith.cmpf oge, %213, %216 : vector<8x1xf32>
    %218 = arith.extui %217 : vector<8x1xi1> to vector<8x1xi32>
    %219 = arith.sitofp %218 : vector<8x1xi32> to vector<8x1xf32>
    %220 = vector.extract_strided_slice %4 {offsets = [0, 384], sizes = [8, 96], strides = [1, 1]} : vector<8x512xf32> to vector<8x96xf32>
    %221 = vector.extract_strided_slice %215 {offsets = [0, 0], sizes = [1, 96], strides = [1, 1]} : vector<8x128xf32> to vector<1x96xf32>
    %222 = vector.broadcast %219 : vector<8x1xf32> to vector<8x96xf32>
    %223 = vector.broadcast %221 : vector<1x96xf32> to vector<8x96xf32>
    %224 = arith.mulf %222, %223 : vector<8x96xf32>
    %225 = arith.addf %220, %224 : vector<8x96xf32>
    %226 = vector.extract_strided_slice %215 {offsets = [1, 0], sizes = [1, 96], strides = [1, 1]} : vector<8x128xf32> to vector<1x96xf32>
    %227 = vector.broadcast %226 : vector<1x96xf32> to vector<8x96xf32>
    %228 = arith.addf %225, %227 : vector<8x96xf32>
    %229 = vector.extract_strided_slice %215 {offsets = [2, 0], sizes = [1, 96], strides = [1, 1]} : vector<8x128xf32> to vector<1x96xf32>
    %230 = vector.broadcast %229 : vector<1x96xf32> to vector<8x96xf32>
    %231 = arith.addf %199, %230 : vector<8x96xf32>
    %232 = arith.addf %228, %231 : vector<8x96xf32>
    %233 = vector.extract_strided_slice %232 {offsets = [0, 0], sizes = [8, 64], strides = [1, 1]} : vector<8x96xf32> to vector<8x64xf32>
    %234 = arith.negf %233 : vector<8x64xf32>
    %235 = math.exp %234 : vector<8x64xf32>
    %cst_64 = arith.constant 1.000000e+00 : f32
    %236 = vector.broadcast %cst_64 : f32 to vector<8x64xf32>
    %237 = arith.addf %236, %235 : vector<8x64xf32>
    %238 = arith.divf %236, %237 : vector<8x64xf32>
    %239 = vector.extract_strided_slice %238 {offsets = [0, 0], sizes = [8, 32], strides = [1, 1]} : vector<8x64xf32> to vector<8x32xf32>
    %240 = vector.extract_strided_slice %238 {offsets = [0, 32], sizes = [8, 32], strides = [1, 1]} : vector<8x64xf32> to vector<8x32xf32>
    %241 = vector.extract_strided_slice %228 {offsets = [0, 64], sizes = [8, 32], strides = [1, 1]} : vector<8x96xf32> to vector<8x32xf32>
    %242 = vector.extract_strided_slice %231 {offsets = [0, 64], sizes = [8, 32], strides = [1, 1]} : vector<8x96xf32> to vector<8x32xf32>
    %243 = arith.mulf %239, %242 : vector<8x32xf32>
    %244 = arith.addf %241, %243 : vector<8x32xf32>
    %245 = math.tanh %244 : vector<8x32xf32>
    %cst_65 = arith.constant 1.000000e+00 : f32
    %246 = vector.broadcast %cst_65 : f32 to vector<8x32xf32>
    %247 = arith.subf %246, %240 : vector<8x32xf32>
    %248 = arith.mulf %247, %245 : vector<8x32xf32>
    %249 = arith.mulf %240, %198 : vector<8x32xf32>
    %250 = arith.addf %248, %249 : vector<8x32xf32>
    %c0_66 = arith.constant 0 : index
    %c896_67 = arith.constant 896 : index
    %251 = vector.load %arg1[%c0_66, %c896_67] : memref<32x1024xf32, #tpu.memory_space<vmem>>, vector<32x128xf32>
    %cst_68 = arith.constant dense<0.000000e+00> : vector<8x128xf32>
    %252 = tpu.matmul %250, %251, %cst_68 {dimension_numbers = #tpu.dot_dimension_numbers<[1], [0], [0], [1], [0, 0, 1, 1], [], []>} : vector<8x32xf32>, vector<32x128xf32>, vector<8x128xf32> -> vector<8x128xf32>
    %253 = arith.addf %252, %29 : vector<8x128xf32>
    %254 = vector.extract_strided_slice %253 {offsets = [0, 0], sizes = [8, 8], strides = [1, 1]} : vector<8x128xf32> to vector<8x8xf32>
    %255 = vector.extract_strided_slice %2 {offsets = [3, 0], sizes = [1, 8], strides = [1, 1]} : vector<8x128xf32> to vector<1x8xf32>
    %256 = vector.broadcast %255 : vector<1x8xf32> to vector<8x8xf32>
    %257 = arith.addf %254, %256 : vector<8x8xf32>
    %258 = vector.extract_strided_slice %253 {offsets = [0, 8], sizes = [8, 8], strides = [1, 1]} : vector<8x128xf32> to vector<8x8xf32>
    %259 = vector.extract_strided_slice %2 {offsets = [4, 0], sizes = [1, 8], strides = [1, 1]} : vector<8x128xf32> to vector<1x8xf32>
    %260 = vector.broadcast %259 : vector<1x8xf32> to vector<8x8xf32>
    %261 = arith.addf %258, %260 : vector<8x8xf32>
    %cst_69 = arith.constant 0.000000e+00 : f32
    %262 = vector.broadcast %cst_69 : f32 to vector<8x8xf32>
    %263 = arith.maximumf %261, %262 : vector<8x8xf32>
    %264 = vector.broadcast %cst_69 : f32 to vector<8x8xf32>
    %265 = arith.subf %261, %264 : vector<8x8xf32>
    %266 = arith.cmpf one, %265, %265 : vector<8x8xf32>
    %267 = vector.broadcast %cst_69 : f32 to vector<8x8xf32>
    %268 = arith.addf %261, %267 : vector<8x8xf32>
    %269 = math.absf %265 : vector<8x8xf32>
    %cst_70 = arith.constant 0.000000e+00 : f32
    %270 = vector.broadcast %cst_70 : f32 to vector<8x8xf32>
    %271 = arith.subf %270, %269 : vector<8x8xf32>
    %272 = math.exp %271 : vector<8x8xf32>
    %273 = math.log1p %272 : vector<8x8xf32>
    %274 = arith.addf %263, %273 : vector<8x8xf32>
    %275 = arith.select %266, %268, %274 : vector<8x8xi1>, vector<8x8xf32>
    %cst_71 = arith.constant 5.000000e-01 : f32
    %276 = vector.broadcast %cst_71 : f32 to vector<8x8xf32>
    %277 = arith.mulf %276, %275 : vector<8x8xf32>
    %278 = math.exp %277 : vector<8x8xf32>
    %c4_72 = arith.constant 4 : index
    %c0_73 = arith.constant 0 : index
    %c0_74 = arith.constant 0 : index
    %279 = vector.load %arg3[%c4_72, %c0_73, %c0_74] : memref<5x8x32xf32, #tpu.memory_space<vmem>>, vector<1x8x32xf32>
    %280 = vector.shape_cast %279 : vector<1x8x32xf32> to vector<8x32xf32>
    %281 = vector.extract_strided_slice %280 {offsets = [0, 0], sizes = [8, 8], strides = [1, 1]} : vector<8x32xf32> to vector<8x8xf32>
    %282 = arith.mulf %278, %281 : vector<8x8xf32>
    %283 = arith.addf %257, %282 : vector<8x8xf32>
    %284 = tpu.iota {dimensions = array<i32: 1>} : vector<1x4xi32>
    %c0_i32 = arith.constant 0 : i32
    %285 = vector.broadcast %c0_i32 : i32 to vector<1x4xi32>
    %286 = arith.cmpi eq, %284, %285 : vector<1x4xi32>
    %287 = arith.extui %286 : vector<1x4xi1> to vector<1x4xi32>
    %288 = arith.sitofp %287 : vector<1x4xi32> to vector<1x4xf32>
    %289 = vector.broadcast %43 : vector<8x1xf32> to vector<8x4xf32>
    %290 = vector.broadcast %288 : vector<1x4xf32> to vector<8x4xf32>
    %291 = arith.mulf %289, %290 : vector<8x4xf32>
    %c1_i32 = arith.constant 1 : i32
    %292 = vector.broadcast %c1_i32 : i32 to vector<1x4xi32>
    %293 = arith.cmpi eq, %284, %292 : vector<1x4xi32>
    %294 = arith.extui %293 : vector<1x4xi1> to vector<1x4xi32>
    %295 = arith.sitofp %294 : vector<1x4xi32> to vector<1x4xf32>
    %296 = vector.broadcast %101 : vector<8x1xf32> to vector<8x4xf32>
    %297 = vector.broadcast %295 : vector<1x4xf32> to vector<8x4xf32>
    %298 = arith.mulf %296, %297 : vector<8x4xf32>
    %299 = arith.addf %291, %298 : vector<8x4xf32>
    %c2_i32 = arith.constant 2 : i32
    %300 = vector.broadcast %c2_i32 : i32 to vector<1x4xi32>
    %301 = arith.cmpi eq, %284, %300 : vector<1x4xi32>
    %302 = arith.extui %301 : vector<1x4xi1> to vector<1x4xi32>
    %303 = arith.sitofp %302 : vector<1x4xi32> to vector<1x4xf32>
    %304 = vector.broadcast %157 : vector<8x1xf32> to vector<8x4xf32>
    %305 = vector.broadcast %303 : vector<1x4xf32> to vector<8x4xf32>
    %306 = arith.mulf %304, %305 : vector<8x4xf32>
    %307 = arith.addf %299, %306 : vector<8x4xf32>
    %c3_i32 = arith.constant 3 : i32
    %308 = vector.broadcast %c3_i32 : i32 to vector<1x4xi32>
    %309 = arith.cmpi eq, %284, %308 : vector<1x4xi32>
    %310 = arith.extui %309 : vector<1x4xi1> to vector<1x4xi32>
    %311 = arith.sitofp %310 : vector<1x4xi32> to vector<1x4xf32>
    %312 = vector.broadcast %213 : vector<8x1xf32> to vector<8x4xf32>
    %313 = vector.broadcast %311 : vector<1x4xf32> to vector<8x4xf32>
    %314 = arith.mulf %312, %313 : vector<8x4xf32>
    %315 = arith.addf %307, %314 : vector<8x4xf32>
    %316 = arith.negf %315 : vector<8x4xf32>
    %317 = math.exp %316 : vector<8x4xf32>
    %cst_75 = arith.constant 1.000000e+00 : f32
    %318 = vector.broadcast %cst_75 : f32 to vector<8x4xf32>
    %319 = arith.addf %318, %317 : vector<8x4xf32>
    %320 = arith.divf %318, %319 : vector<8x4xf32>
    %cst_76 = arith.constant 0.000000e+00 : f32
    %321 = vector.broadcast %cst_76 : f32 to vector<8x100xf32>
    %322 = tpu.concatenate %283, %257, %275, %320, %321 in 1 : vector<8x8xf32>, vector<8x8xf32>, vector<8x8xf32>, vector<8x4xf32>, vector<8x100xf32> -> vector<8x128xf32>
    %c0_77 = arith.constant 0 : index
    %c0_78 = arith.constant 0 : index
    %323 = vector.load %arg4[%c0_77, %c0_78] : memref<8x128xf32, #tpu.memory_space<vmem>>, vector<8x128xf32>
    tpu.vector_store %arg4[%c0_77, %c0_78], %322 {strides = array<i32>} : memref<8x128xf32, #tpu.memory_space<vmem>>, vector<8x128xf32>,
    return
  }
}

</mosaic_0001>

<llo_original>
// kernel: tpu_custom_call.1
$region0: #{tpu_custom_call.1}
  #allocation0 [shape = 'u32[]', space=smem, size = 0x4, offset = 0x4, fixed_abs, tag = 'smem constant byte address 0x4 - core index']
  #allocation1 [shape = 'u32[72,128]{1,0:T(1,128)}', space=vmem, size = 0x9000, scoped, tag = 'internal scratch']
  %s0 = inlined_call_operand.hbm [shape: f32[8,32], index: 0, kind: input, shape index: {}]
  %s1 = inlined_call_operand.hbm [shape: f32[32,1024], index: 1, kind: input, shape index: {}]
  %s2 = inlined_call_operand.hbm [shape: f32[5,8,128], index: 2, kind: input, shape index: {}]
  %s3 = inlined_call_operand.hbm [shape: f32[5,8,32], index: 3, kind: input, shape index: {}]
  %s4 = inlined_call_operand.hbm [shape: f32[8,128], index: 4, kind: output, shape index: {}]
  %s5 = sld [smem:[#allocation0]]
  $region42: #{tpu_custom_call.1} parent=0
    _
  %s7 = ssub.s32 1, %s5
  %s8 = scalar_select 0, %s7, %s5
  $region1: #{tpu_custom_call.1} parent=0
    #allocation2 [shape = 'u8[4096]{0}', space=vmem, size = 0x1000, scoped, tag = 'input window, operand 0, single buffered']
    #allocation3 [shape = 's32[1]{0}', space=sflag, size = 0x4, scoped, tag = 'scoped memory for tpu_custom_call.1']
    #allocation4 [shape = 's32[1]{0}', space=sflag, size = 0x4, scoped, tag = 'scoped memory for tpu_custom_call.1']
    #allocation5 [shape = 'u8[131072]{0}', space=vmem, size = 0x20000, scoped, tag = 'input window, operand 1, single buffered']
    #allocation6 [shape = 's32[1]{0}', space=sflag, size = 0x4, scoped, tag = 'scoped memory for tpu_custom_call.1']
    #allocation7 [shape = 'u8[20480]{0}', space=vmem, size = 0x5000, scoped, tag = 'input window, operand 2, single buffered']
    #allocation8 [shape = 'u8[20480]{0}', space=vmem, size = 0x5000, scoped, tag = 'input window, operand 3, single buffered']
    #allocation9 [shape = 's32[1]{0}', space=sflag, size = 0x4, scoped, tag = 'scoped memory for tpu_custom_call.1']
    #allocation10 [shape = 'u8[4096]{0}', space=vmem, size = 0x1000, scoped, tag = 'output window, operand 0, single buffered']
    %9 = vsyncpa [#allocation3], 0
    %10 = vsyncpa [#allocation6], 0
    %11 = vsyncpa [#allocation9], 0
    %12 = vsyncpa [#allocation4], 0
    // Predicated region
    $region2: #{tpu_custom_call.1} parent=1 // pred_check
      _
    $region3: #{tpu_custom_call.1} parent=1 // pred_check_branch
      %14 = sbr.rel (0) target = $region5
    $region4: #{tpu_custom_call.1} parent=1 // pred_region
      %16 = vsyncadd [#allocation3], 0
      %s18 = sshll.u32 %s0, 4
      %s19 = int_to_ptr.hbm [resolvable:$true] %s18
      %s20 = sshll.u32 [#allocation2], 4
      %s21 = int_to_ptr.vmem [resolvable:$true] %s20
      %23 = dma.hbm_to_vmem [thread:$0]  %s19, 128, %s21, [#allocation3]
    $region5: #{tpu_custom_call.1} parent=1 // pred_fallthru
      _
    // Predicated region
    $region6: #{tpu_custom_call.1} parent=1 // pred_check
      _
    $region7: #{tpu_custom_call.1} parent=1 // pred_check_branch
      %25 = sbr.rel (0) target = $region9
    $region8: #{tpu_custom_call.1} parent=1 // pred_region
      %27 = vsyncadd [#allocation6], 0
      %s28 = sshll.u32 %s1, 4
      %s29 = int_to_ptr.hbm [resolvable:$true] %s28
      %s30 = sshll.u32 [#allocation5], 4
      %s31 = int_to_ptr.vmem [resolvable:$true] %s30
      %36 = dma.hbm_to_vmem [thread:$0]  %s29, 4096, %s31, [#allocation6], 1024, 1024, 64
    $region9: #{tpu_custom_call.1} parent=1 // pred_fallthru
      _
    // Predicated region
    $region10: #{tpu_custom_call.1} parent=1 // pred_check
      _
    $region11: #{tpu_custom_call.1} parent=1 // pred_check_branch
      %38 = sbr.rel (0) target = $region13
    $region12: #{tpu_custom_call.1} parent=1 // pred_region
      %40 = vsyncadd [#allocation6], 0
      %s41 = sshll.u32 %s2, 4
      %s42 = int_to_ptr.hbm [resolvable:$true] %s41
      %s43 = sshll.u32 [#allocation7], 4
      %s44 = int_to_ptr.vmem [resolvable:$true] %s43
      %49 = dma.hbm_to_vmem [thread:$0]  %s42, 640, %s44, [#allocation6], 128, 128, 8
    $region13: #{tpu_custom_call.1} parent=1 // pred_fallthru
      _
    // Predicated region
    $region14: #{tpu_custom_call.1} parent=1 // pred_check
      _
    $region15: #{tpu_custom_call.1} parent=1 // pred_check_branch
      %51 = sbr.rel (0) target = $region17
    $region16: #{tpu_custom_call.1} parent=1 // pred_region
      %53 = vsyncadd [#allocation9], 0
      %s54 = sshll.u32 %s3, 4
      %s55 = int_to_ptr.hbm [resolvable:$true] %s54
      %s56 = sshll.u32 [#allocation8], 4
      %s57 = int_to_ptr.vmem [resolvable:$true] %s56
      %62 = dma.hbm_to_vmem [thread:$0]  %s55, 640, %s57, [#allocation9], 128, 128, 8
    $region17: #{tpu_custom_call.1} parent=1 // pred_fallthru
      _
    // Predicated region
    $region18: #{tpu_custom_call.1} parent=1 // pred_check
      _
    $region19: #{tpu_custom_call.1} parent=1 // pred_check_branch
      %64 = sbr.rel (0) target = $region21
    $region20: #{tpu_custom_call.1} parent=1 // pred_region
      %66 = dma.done [#allocation3], 128
    $region21: #{tpu_custom_call.1} parent=1 // pred_fallthru
      _
    // Predicated region
    $region22: #{tpu_custom_call.1} parent=1 // pred_check
      _
    $region23: #{tpu_custom_call.1} parent=1 // pred_check_branch
      %68 = sbr.rel (0) target = $region25
    $region24: #{tpu_custom_call.1} parent=1 // pred_region
      %70 = dma.done [#allocation6], 4096
    $region25: #{tpu_custom_call.1} parent=1 // pred_fallthru
      _
    // Predicated region
    $region26: #{tpu_custom_call.1} parent=1 // pred_check
      _
    $region27: #{tpu_custom_call.1} parent=1 // pred_check_branch
      %72 = sbr.rel (0) target = $region29
    $region28: #{tpu_custom_call.1} parent=1 // pred_region
      %74 = dma.done [#allocation6], 640
    $region29: #{tpu_custom_call.1} parent=1 // pred_fallthru
      _
    // Predicated region
    $region30: #{tpu_custom_call.1} parent=1 // pred_check
      _
    $region31: #{tpu_custom_call.1} parent=1 // pred_check_branch
      %76 = sbr.rel (0) target = $region33
    $region32: #{tpu_custom_call.1} parent=1 // pred_region
      %78 = dma.done [#allocation9], 640
    $region33: #{tpu_custom_call.1} parent=1 // pred_fallthru
      _
    %v79 = vld [vmem:[#allocation2] sm:$0xff]
    %s80 = scalar_lea.vmem [#allocation7], 32
    %v81 = vld [vmem:[%s80] sm:$0xff]
    %v82 = vld [vmem:[#allocation5] sm:$0xff]
    %v83 = vld [vmem:[#allocation5 + $0x8] sm:$0xff]
    %v84 = vld [vmem:[#allocation5 + $0x10] sm:$0xff]
    %v85 = vld [vmem:[#allocation5 + $0x18] sm:$0xff]
    %v86 = vld [vmem:[#allocation5 + $0x40] sm:$0xff]
    %v87 = vld [vmem:[#allocation5 + $0x48] sm:$0xff]
    %v88 = vld [vmem:[#allocation5 + $0x50] sm:$0xff]
    %v89 = vld [vmem:[#allocation5 + $0x58] sm:$0xff]
    %v90 = vld [vmem:[#allocation5 + $0x80] sm:$0xff]
    %v91 = vld [vmem:[#allocation5 + $0x88] sm:$0xff]
    %v92 = vld [vmem:[#allocation5 + $0x90] sm:$0xff]
    %v93 = vld [vmem:[#allocation5 + $0x98] sm:$0xff]
    %v94 = vld [vmem:[#allocation5 + $0xc0] sm:$0xff]
    %v95 = vld [vmem:[#allocation5 + $0xc8] sm:$0xff]
    %v96 = vld [vmem:[#allocation5 + $0xd0] sm:$0xff]
    %v97 = vld [vmem:[#allocation5 + $0xd8] sm:$0xff]
    %vm98 = vcmask 261120
    %v100 = vsel %vm98, %v79, 0
    %102 = vmatpush.msra.mxu0 0.0
    %103 = vmatpush.msra.mxu0 0.0
    %104 = vmatpush.msra.mxu0 0.0
    %105 = vmatpush.msra.mxu0 0.0
    %106 = vmatpush.msra.mxu0 0.0
    %107 = vmatpush.msra.mxu0 0.0
    %108 = vmatpush.msra.mxu0 0.0
    %109 = vmatpush.msra.mxu0 0.0
    %110 = vmatpush.msra.mxu0 0.0
    %111 = vmatpush.msra.mxu0 0.0
    %112 = vmatpush.msra.mxu0 0.0
    %113 = vmatpush.msra.mxu0 0.0
    %114 = vmatpush.msra.mxu0 %v94
    %115 = vmatpush.msra.mxu0 %v90
    %116 = vmatpush.msra.mxu0 %v86
    %117 = vmatpush.msra.mxu0 %v82
    %118 = vmatmul.f32.gmra.mxu0 %v100
    %v119 = vpop.f32.mrf.mxu0
    %v120 = vadd.f32 0.0, %v119
    %121 = vdwg.mxu0
    %122 = vmatpush.msra.mxu0 0.0
    %123 = vmatpush.msra.mxu0 0.0
    %124 = vmatpush.msra.mxu0 0.0
    %125 = vmatpush.msra.mxu0 0.0
    %126 = vmatpush.msra.mxu0 0.0
    %127 = vmatpush.msra.mxu0 0.0
    %128 = vmatpush.msra.mxu0 0.0
    %129 = vmatpush.msra.mxu0 0.0
    %130 = vmatpush.msra.mxu0 0.0
    %131 = vmatpush.msra.mxu0 0.0
    %132 = vmatpush.msra.mxu0 0.0
    %133 = vmatpush.msra.mxu0 0.0
    %134 = vmatpush.msra.mxu0 %v95
    %135 = vmatpush.msra.mxu0 %v91
    %136 = vmatpush.msra.mxu0 %v87
    %137 = vmatpush.msra.mxu0 %v83
    %138 = vmatmul.f32.gmra.mxu0 %v100
    %v139 = vpop.f32.mrf.mxu0
    %v140 = vadd.f32 0.0, %v139
    %141 = vdwg.mxu0
    %142 = vmatpush.msra.mxu0 0.0
    %143 = vmatpush.msra.mxu0 0.0
    %144 = vmatpush.msra.mxu0 0.0
    %145 = vmatpush.msra.mxu0 0.0
    %146 = vmatpush.msra.mxu0 0.0
    %147 = vmatpush.msra.mxu0 0.0
    %148 = vmatpush.msra.mxu0 0.0
    %149 = vmatpush.msra.mxu0 0.0
    %150 = vmatpush.msra.mxu0 0.0
    %151 = vmatpush.msra.mxu0 0.0
    %152 = vmatpush.msra.mxu0 0.0
    %153 = vmatpush.msra.mxu0 0.0
    %154 = vmatpush.msra.mxu0 %v96
    %155 = vmatpush.msra.mxu0 %v92
    %156 = vmatpush.msra.mxu0 %v88
    %157 = vmatpush.msra.mxu0 %v84
    %158 = vmatmul.f32.gmra.mxu0 %v100
    %v159 = vpop.f32.mrf.mxu0
    %v160 = vadd.f32 0.0, %v159
    %161 = vdwg.mxu0
    %162 = vmatpush.msra.mxu0 0.0
    %163 = vmatpush.msra.mxu0 0.0
    %164 = vmatpush.msra.mxu0 0.0
    %165 = vmatpush.msra.mxu0 0.0
    %166 = vmatpush.msra.mxu0 0.0
    %167 = vmatpush.msra.mxu0 0.0
    %168 = vmatpush.msra.mxu0 0.0
    %169 = vmatpush.msra.mxu0 0.0
    %170 = vmatpush.msra.mxu0 0.0
    %171 = vmatpush.msra.mxu0 0.0
    %172 = vmatpush.msra.mxu0 0.0
    %173 = vmatpush.msra.mxu0 0.0
    %174 = vmatpush.msra.mxu0 %v97
    %175 = vmatpush.msra.mxu0 %v93
    %176 = vmatpush.msra.mxu0 %v89
    %177 = vmatpush.msra.mxu0 %v85
    %178 = vmatmul.f32.gmra.mxu0 %v100
    %v179 = vpop.f32.mrf.mxu0
    %v180 = vadd.f32 0.0, %v179
    %181 = vdwg.mxu0
    %v182 = vld [vmem:[#allocation8] sm:$0xff]
    %v183 = vmul.f32 %v182, 1.0025032
    %s184 = scalar_lea.vmem [#allocation8], 8
    %v185 = vld [vmem:[%s184] sm:$0xff]
    %v186 = vmul.f32 %v185, 1.0025032
    %s187 = scalar_lea.vmem [#allocation8], 16
    %v188 = vld [vmem:[%s187] sm:$0xff]
    %v189 = vmul.f32 %v188, 1.0025032
    %s190 = scalar_lea.vmem [#allocation8], 24
    %v191 = vld [vmem:[%s190] sm:$0xff]
    %v192 = vmul.f32 %v191, 1.0025032
    %v193 = vld [vmem:[#allocation5 + $0x20] sm:$0xff]
    %v194 = vld [vmem:[#allocation5 + $0x60] sm:$0xff]
    %v195 = vld [vmem:[#allocation5 + $0xa0] sm:$0xff]
    %v196 = vld [vmem:[#allocation5 + $0xe0] sm:$0xff]
    %v198 = vsel %vm98, %v183, 0
    %200 = vmatpush.msra.mxu0 0.0
    %201 = vmatpush.msra.mxu0 0.0
    %202 = vmatpush.msra.mxu0 0.0
    %203 = vmatpush.msra.mxu0 0.0
    %204 = vmatpush.msra.mxu0 0.0
    %205 = vmatpush.msra.mxu0 0.0
    %206 = vmatpush.msra.mxu0 0.0
    %207 = vmatpush.msra.mxu0 0.0
    %208 = vmatpush.msra.mxu0 0.0
    %209 = vmatpush.msra.mxu0 0.0
    %210 = vmatpush.msra.mxu0 0.0
    %211 = vmatpush.msra.mxu0 0.0
    %212 = vmatpush.msra.mxu0 %v196
    %213 = vmatpush.msra.mxu0 %v195
    %214 = vmatpush.msra.mxu0 %v194
    %215 = vmatpush.msra.mxu0 %v193
    %216 = vmatmul.f32.gmra.mxu0 %v198
    %v217 = vpop.f32.mrf.mxu0
    %v218 = vadd.f32 0.0, %v217
    %219 = vdwg.mxu0
    %v220 = vld [vmem:[#allocation5 + $0x28] sm:$0xff]
    %v221 = vld [vmem:[#allocation5 + $0x68] sm:$0xff]
    %v222 = vld [vmem:[#allocation5 + $0xa8] sm:$0xff]
    %v223 = vld [vmem:[#allocation5 + $0xe8] sm:$0xff]
    %v225 = vsel %vm98, %v186, 0
    %227 = vmatpush.msra.mxu0 0.0
    %228 = vmatpush.msra.mxu0 0.0
    %229 = vmatpush.msra.mxu0 0.0
    %230 = vmatpush.msra.mxu0 0.0
    %231 = vmatpush.msra.mxu0 0.0
    %232 = vmatpush.msra.mxu0 0.0
    %233 = vmatpush.msra.mxu0 0.0
    %234 = vmatpush.msra.mxu0 0.0
    %235 = vmatpush.msra.mxu0 0.0
    %236 = vmatpush.msra.mxu0 0.0
    %237 = vmatpush.msra.mxu0 0.0
    %238 = vmatpush.msra.mxu0 0.0
    %239 = vmatpush.msra.mxu0 %v223
    %240 = vmatpush.msra.mxu0 %v222
    %241 = vmatpush.msra.mxu0 %v221
    %242 = vmatpush.msra.mxu0 %v220
    %243 = vmatmul.f32.gmra.mxu0 %v225
    %v244 = vpop.f32.mrf.mxu0
    %v245 = vadd.f32 0.0, %v244
    %246 = vdwg.mxu0
    %v247 = vld [vmem:[#allocation5 + $0x30] sm:$0xff]
    %v248 = vld [vmem:[#allocation5 + $0x70] sm:$0xff]
    %v249 = vld [vmem:[#allocation5 + $0xb0] sm:$0xff]
    %v250 = vld [vmem:[#allocation5 + $0xf0] sm:$0xff]
    %v252 = vsel %vm98, %v189, 0
    %254 = vmatpush.msra.mxu0 0.0
    %255 = vmatpush.msra.mxu0 0.0
    %256 = vmatpush.msra.mxu0 0.0
    %257 = vmatpush.msra.mxu0 0.0
    %258 = vmatpush.msra.mxu0 0.0
    %259 = vmatpush.msra.mxu0 0.0
    %260 = vmatpush.msra.mxu0 0.0
    %261 = vmatpush.msra.mxu0 0.0
    %262 = vmatpush.msra.mxu0 0.0
    %263 = vmatpush.msra.mxu0 0.0
    %264 = vmatpush.msra.mxu0 0.0
    %265 = vmatpush.msra.mxu0 0.0
    %266 = vmatpush.msra.mxu0 %v250
    %267 = vmatpush.msra.mxu0 %v249
    %268 = vmatpush.msra.mxu0 %v248
    %269 = vmatpush.msra.mxu0 %v247
    %270 = vmatmul.f32.gmra.mxu0 %v252
    %v271 = vpop.f32.mrf.mxu0
    %v272 = vadd.f32 0.0, %v271
    %273 = vdwg.mxu0
    %v274 = vld [vmem:[#allocation5 + $0x38] sm:$0xff]
    %v275 = vld [vmem:[#allocation5 + $0x78] sm:$0xff]
    %v276 = vld [vmem:[#allocation5 + $0xb8] sm:$0xff]
    %v277 = vld [vmem:[#allocation5 + $0xf8] sm:$0xff]
    %v279 = vsel %vm98, %v192, 0
    %281 = vmatpush.msra.mxu0 0.0
    %282 = vmatpush.msra.mxu0 0.0
    %283 = vmatpush.msra.mxu0 0.0
    %284 = vmatpush.msra.mxu0 0.0
    %285 = vmatpush.msra.mxu0 0.0
    %286 = vmatpush.msra.mxu0 0.0
    %287 = vmatpush.msra.mxu0 0.0
    %288 = vmatpush.msra.mxu0 0.0
    %289 = vmatpush.msra.mxu0 0.0
    %290 = vmatpush.msra.mxu0 0.0
    %291 = vmatpush.msra.mxu0 0.0
    %292 = vmatpush.msra.mxu0 0.0
    %293 = vmatpush.msra.mxu0 %v277
    %294 = vmatpush.msra.mxu0 %v276
    %295 = vmatpush.msra.mxu0 %v275
    %296 = vmatpush.msra.mxu0 %v274
    %297 = vmatmul.f32.gmra.mxu0 %v279
    %v298 = vpop.f32.mrf.mxu0
    %v299 = vadd.f32 0.0, %v298
    %300 = vdwg.mxu0
    %v301 = vperm.slane %v81, 0
    %v302 = vadd.f32 %v120, %v301
    %v303 = vmax.f32 %v302, 0.0
    %v304 = vperm.slane %v81, 1
    %v305 = vmul.f32 %v303, %v304
    %v306 = vsel %vm98, %v305, 0.0
    %307 = vadd.xlane.f32.xlu0 %v306
    %v308 = vpop.xlane.xlu0 %307
    %v309 = vperm.slane %v81, 2
    %v310 = vadd.f32 %v308, %v309
    %v311 = vld [vmem:[#allocation7] sm:$0xff]
    %vm312 = vcmp.ge.f32.partialorder %v310, 0.0
    %v313 = vsel %vm312, 1, 0
    %v314 = vcvt.s32.f32 %v313
    %316 = vset.pattern.permute.xlu0 0
    %317 = vperm.xlu0 %316, %v314
    %v318 = vpop.permute.xlu0 %317
    %v320 = vperm.slane %v311, 0
    %v321 = vmul.f32 %v318, %v320
    %323 = vrot.lane.b32.xlu0 %v321, 32
    %v324 = vpop.permute.xlu0 %323
    %v326 = vadd.f32 %v120, %v324
    %v327 = vperm.slane %v311, 1
    %329 = vrot.lane.b32.xlu0 %v327, 32
    %v330 = vpop.permute.xlu0 %329
    %v332 = vadd.f32 %v326, %v330
    %v333 = vperm.slane %v311, 2
    %v334 = vadd.f32 %v333, 0.0
    %336 = vrot.lane.b32.xlu0 %v334, 32
    %v337 = vpop.permute.xlu0 %336
    %v339 = vadd.f32 %v332, %v337
    %v340 = vxor.u32 %v339, 2147483648
    %v341 = vmul.f32 %v340, 1.442695
    %v342 = vpow.pop %v341
    %v343 = vadd.f32 %v342, 1.0
    %v344 = vrcp.pop %v343
    %v345 = vmul.f32 %v343, %v344
    %v346 = vsub.f32 1.0, %v345
    %v347 = vmul.f32 %v344, %v346
    %v348 = vadd.f32 %v344, %v347
    %vm349 = vweird.f32 %v343
    %vm350 = vweird.f32 %v344
    %vm351 = vmor %vm349, %vm350
    %v352 = vsel %vm351, %v344, %v348
    %v353 = vand.u32 2147483647, %v343
    %vm354 = vcmp.eq.f32.partialorder %v353, 8.507059e+37
    %v355 = vand.u32 %v343, 2147483648
    %v356 = vor.u32 1.1754944e-38, %v355
    %v357 = vsel %vm354, %v356, %v352
    %v358 = vmul.f32 1.0, %v357
    %359 = vrot.lane.b32.xlu0 %v334, 96
    %v360 = vpop.permute.xlu0 %359
    %v362 = vmul.f32 %v358, %v360
    %364 = vrot.lane.b32.xlu0 %v362, 64
    %v365 = vpop.permute.xlu0 %364
    %v367 = vadd.f32 %v332, %v365
    %v368 = vtanh.pop %v367
    %v369 = vsub.f32 1.0, %v358
    %371 = vrot.lane.b32.xlu0 %v368, 96
    %v372 = vpop.permute.xlu0 %371
    %v374 = vmul.f32 %v369, %v372
    %v375 = vmul.f32 %v358, 0.0
    %v376 = vadd.f32 %v374, %v375
    %378 = vrot.lane.b32.xlu0 %v376, 64
    %v379 = vpop.permute.xlu0 %378
    %v380 = vsel %vm98, %v379, 0
    %382 = vmatpush.msra.mxu0 0.0
    %383 = vmatpush.msra.mxu0 0.0
    %384 = vmatpush.msra.mxu0 0.0
    %385 = vmatpush.msra.mxu0 0.0
    %386 = vmatpush.msra.mxu0 0.0
    %387 = vmatpush.msra.mxu0 0.0
    %388 = vmatpush.msra.mxu0 0.0
    %389 = vmatpush.msra.mxu0 0.0
    %390 = vmatpush.msra.mxu0 0.0
    %391 = vmatpush.msra.mxu0 0.0
    %392 = vmatpush.msra.mxu0 0.0
    %393 = vmatpush.msra.mxu0 0.0
    %394 = vmatpush.msra.mxu0 %v196
    %395 = vmatpush.msra.mxu0 %v195
    %396 = vmatpush.msra.mxu0 %v194
    %397 = vmatpush.msra.mxu0 %v193
    %398 = vmatmul.f32.gmra.mxu0 %v380
    %v399 = vpop.f32.mrf.mxu0
    %v400 = vadd.f32 %v218, %v399
    %401 = vdwg.mxu0
    %402 = vrot.lane.b32.xlu0 %v183, 64
    %v403 = vpop.permute.xlu0 %402
    %v405 = vadd.f32 %v376, %v403
    %v406 = vperm.slane %v311, 3
    %408 = vrot.lane.b32.xlu0 %v406, 96
    %v409 = vpop.permute.xlu0 %408
    %v411 = vadd.f32 %v400, %v409
    %v412 = vmax.f32 %v411, 0.0
    %v413 = vperm.slane %v311, 4
    %415 = vrot.lane.b32.xlu0 %v413, 96
    %v416 = vpop.permute.xlu0 %415
    %v418 = vmul.f32 %v412, %v416
    %420 = vrot.lane.b32.xlu0 %v418, 32
    %v421 = vpop.permute.xlu0 %420
    %v423 = vsel %vm98, %v421, 0.0
    %424 = vadd.xlane.f32.xlu0 %v423
    %v425 = vpop.xlane.xlu0 %424
    %v426 = vperm.slane %v311, 5
    %v427 = vadd.f32 %v425, %v426
    %s428 = scalar_lea.vmem [#allocation7], 8
    %v429 = vld [vmem:[%s428] sm:$0xff]
    %vm430 = vcmp.ge.f32.partialorder %v427, 0.0
    %v431 = vsel %vm430, 1, 0
    %v432 = vcvt.s32.f32 %v431
    %434 = vset.pattern.permute.xlu0 0
    %435 = vperm.xlu0 %434, %v432
    %v436 = vpop.permute.xlu0 %435
    %v438 = vperm.slane %v429, 0
    %v439 = vmul.f32 %v436, %v438
    %v440 = vadd.f32 %v140, %v439
    %v441 = vperm.slane %v429, 1
    %v442 = vadd.f32 %v440, %v441
    %v443 = vperm.slane %v429, 2
    %v444 = vadd.f32 %v400, %v443
    %v445 = vadd.f32 %v442, %v444
    %v446 = vxor.u32 %v445, 2147483648
    %v447 = vmul.f32 %v446, 1.442695
    %v448 = vpow.pop %v447
    %v449 = vadd.f32 %v448, 1.0
    %v450 = vrcp.pop %v449
    %v451 = vmul.f32 %v449, %v450
    %v452 = vsub.f32 1.0, %v451
    %v453 = vmul.f32 %v450, %v452
    %v454 = vadd.f32 %v450, %v453
    %vm455 = vweird.f32 %v449
    %vm456 = vweird.f32 %v450
    %vm457 = vmor %vm455, %vm456
    %v458 = vsel %vm457, %v450, %v454
    %v459 = vand.u32 2147483647, %v449
    %vm460 = vcmp.eq.f32.partialorder %v459, 8.507059e+37
    %v461 = vand.u32 %v449, 2147483648
    %v462 = vor.u32 1.1754944e-38, %v461
    %v463 = vsel %vm460, %v462, %v458
    %v464 = vmul.f32 1.0, %v463
    %466 = vrot.lane.b32.xlu0 %v444, 64
    %v467 = vpop.permute.xlu0 %466
    %v469 = vmul.f32 %v464, %v467
    %471 = vrot.lane.b32.xlu0 %v469, 64
    %v472 = vpop.permute.xlu0 %471
    %v474 = vadd.f32 %v442, %v472
    %v475 = vtanh.pop %v474
    %v476 = vsub.f32 1.0, %v464
    %478 = vrot.lane.b32.xlu0 %v475, 96
    %v479 = vpop.permute.xlu0 %478
    %v481 = vmul.f32 %v476, %v479
    %483 = vrot.lane.b32.xlu0 %v405, 96
    %v484 = vpop.permute.xlu0 %483
    %v486 = vmul.f32 %v464, %v484
    %v487 = vadd.f32 %v481, %v486
    %489 = vrot.lane.b32.xlu0 %v487, 96
    %v490 = vpop.permute.xlu0 %489
    %v491 = vsel %vm98, %v490, 0
    %493 = vmatpush.msra.mxu0 0.0
    %494 = vmatpush.msra.mxu0 0.0
    %495 = vmatpush.msra.mxu0 0.0
    %496 = vmatpush.msra.mxu0 0.0
    %497 = vmatpush.msra.mxu0 0.0
    %498 = vmatpush.msra.mxu0 0.0
    %499 = vmatpush.msra.mxu0 0.0
    %500 = vmatpush.msra.mxu0 0.0
    %501 = vmatpush.msra.mxu0 0.0
    %502 = vmatpush.msra.mxu0 0.0
    %503 = vmatpush.msra.mxu0 0.0
    %504 = vmatpush.msra.mxu0 0.0
    %505 = vmatpush.msra.mxu0 %v223
    %506 = vmatpush.msra.mxu0 %v222
    %507 = vmatpush.msra.mxu0 %v221
    %508 = vmatpush.msra.mxu0 %v220
    %509 = vmatmul.f32.gmra.mxu0 %v491
    %v510 = vpop.f32.mrf.mxu0
    %v511 = vadd.f32 %v245, %v510
    %512 = vdwg.mxu0
    %513 = vrot.lane.b32.xlu0 %v186, 32
    %v514 = vpop.permute.xlu0 %513
    %v516 = vadd.f32 %v487, %v514
    %v517 = vperm.slane %v429, 3
    %519 = vrot.lane.b32.xlu0 %v517, 96
    %v520 = vpop.permute.xlu0 %519
    %v522 = vadd.f32 %v511, %v520
    %v523 = vmax.f32 %v522, 0.0
    %v524 = vperm.slane %v429, 4
    %526 = vrot.lane.b32.xlu0 %v524, 96
    %v527 = vpop.permute.xlu0 %526
    %v529 = vmul.f32 %v523, %v527
    %531 = vrot.lane.b32.xlu0 %v529, 32
    %v532 = vpop.permute.xlu0 %531
    %v534 = vsel %vm98, %v532, 0.0
    %535 = vadd.xlane.f32.xlu0 %v534
    %v536 = vpop.xlane.xlu0 %535
    %v537 = vperm.slane %v429, 5
    %v538 = vadd.f32 %v536, %v537
    %s539 = scalar_lea.vmem [#allocation7], 16
    %v540 = vld [vmem:[%s539] sm:$0xff]
    %vm541 = vcmp.ge.f32.partialorder %v538, 0.0
    %v542 = vsel %vm541, 1, 0
    %v543 = vcvt.s32.f32 %v542
    %545 = vset.pattern.permute.xlu0 0
    %546 = vperm.xlu0 %545, %v543
    %v547 = vpop.permute.xlu0 %546
    %v549 = vperm.slane %v540, 0
    %v550 = vmul.f32 %v547, %v549
    %v551 = vadd.f32 %v160, %v550
    %v552 = vperm.slane %v540, 1
    %v553 = vadd.f32 %v551, %v552
    %v554 = vperm.slane %v540, 2
    %v555 = vadd.f32 %v511, %v554
    %v556 = vadd.f32 %v553, %v555
    %v557 = vxor.u32 %v556, 2147483648
    %v558 = vmul.f32 %v557, 1.442695
    %v559 = vpow.pop %v558
    %v560 = vadd.f32 %v559, 1.0
    %v561 = vrcp.pop %v560
    %v562 = vmul.f32 %v560, %v561
    %v563 = vsub.f32 1.0, %v562
    %v564 = vmul.f32 %v561, %v563
    %v565 = vadd.f32 %v561, %v564
    %vm566 = vweird.f32 %v560
    %vm567 = vweird.f32 %v561
    %vm568 = vmor %vm566, %vm567
    %v569 = vsel %vm568, %v561, %v565
    %v570 = vand.u32 2147483647, %v560
    %vm571 = vcmp.eq.f32.partialorder %v570, 8.507059e+37
    %v572 = vand.u32 %v560, 2147483648
    %v573 = vor.u32 1.1754944e-38, %v572
    %v574 = vsel %vm571, %v573, %v569
    %v575 = vmul.f32 1.0, %v574
    %577 = vrot.lane.b32.xlu0 %v555, 64
    %v578 = vpop.permute.xlu0 %577
    %v580 = vmul.f32 %v575, %v578
    %582 = vrot.lane.b32.xlu0 %v580, 64
    %v583 = vpop.permute.xlu0 %582
    %v585 = vadd.f32 %v553, %v583
    %v586 = vtanh.pop %v585
    %v587 = vsub.f32 1.0, %v575
    %589 = vrot.lane.b32.xlu0 %v586, 96
    %v590 = vpop.permute.xlu0 %589
    %v592 = vmul.f32 %v587, %v590
    %v593 = vmul.f32 %v575, %v516
    %v594 = vadd.f32 %v592, %v593
    %596 = vrot.lane.b32.xlu0 %v594, 96
    %v597 = vpop.permute.xlu0 %596
    %v598 = vsel %vm98, %v597, 0
    %600 = vmatpush.msra.mxu0 0.0
    %601 = vmatpush.msra.mxu0 0.0
    %602 = vmatpush.msra.mxu0 0.0
    %603 = vmatpush.msra.mxu0 0.0
    %604 = vmatpush.msra.mxu0 0.0
    %605 = vmatpush.msra.mxu0 0.0
    %606 = vmatpush.msra.mxu0 0.0
    %607 = vmatpush.msra.mxu0 0.0
    %608 = vmatpush.msra.mxu0 0.0
    %609 = vmatpush.msra.mxu0 0.0
    %610 = vmatpush.msra.mxu0 0.0
    %611 = vmatpush.msra.mxu0 0.0
    %612 = vmatpush.msra.mxu0 %v250
    %613 = vmatpush.msra.mxu0 %v249
    %614 = vmatpush.msra.mxu0 %v248
    %615 = vmatpush.msra.mxu0 %v247
    %616 = vmatmul.f32.gmra.mxu0 %v598
    %v617 = vpop.f32.mrf.mxu0
    %v618 = vadd.f32 %v272, %v617
    %619 = vdwg.mxu0
    %620 = vrot.lane.b32.xlu0 %v189, 32
    %v621 = vpop.permute.xlu0 %620
    %v623 = vadd.f32 %v594, %v621
    %v624 = vperm.slane %v540, 3
    %626 = vrot.lane.b32.xlu0 %v624, 96
    %v627 = vpop.permute.xlu0 %626
    %v629 = vadd.f32 %v618, %v627
    %v630 = vmax.f32 %v629, 0.0
    %v631 = vperm.slane %v540, 4
    %633 = vrot.lane.b32.xlu0 %v631, 96
    %v634 = vpop.permute.xlu0 %633
    %v636 = vmul.f32 %v630, %v634
    %638 = vrot.lane.b32.xlu0 %v636, 32
    %v639 = vpop.permute.xlu0 %638
    %v641 = vsel %vm98, %v639, 0.0
    %642 = vadd.xlane.f32.xlu0 %v641
    %v643 = vpop.xlane.xlu0 %642
    %v644 = vperm.slane %v540, 5
    %v645 = vadd.f32 %v643, %v644
    %s646 = scalar_lea.vmem [#allocation7], 24
    %v647 = vld [vmem:[%s646] sm:$0xff]
    %vm648 = vcmp.ge.f32.partialorder %v645, 0.0
    %v649 = vsel %vm648, 1, 0
    %v650 = vcvt.s32.f32 %v649
    %652 = vset.pattern.permute.xlu0 0
    %653 = vperm.xlu0 %652, %v650
    %v654 = vpop.permute.xlu0 %653
    %v656 = vperm.slane %v647, 0
    %v657 = vmul.f32 %v654, %v656
    %v658 = vadd.f32 %v180, %v657
    %v659 = vperm.slane %v647, 1
    %v660 = vadd.f32 %v658, %v659
    %v661 = vperm.slane %v647, 2
    %v662 = vadd.f32 %v618, %v661
    %v663 = vadd.f32 %v660, %v662
    %v664 = vxor.u32 %v663, 2147483648
    %v665 = vmul.f32 %v664, 1.442695
    %v666 = vpow.pop %v665
    %v667 = vadd.f32 %v666, 1.0
    %v668 = vrcp.pop %v667
    %v669 = vmul.f32 %v667, %v668
    %v670 = vsub.f32 1.0, %v669
    %v671 = vmul.f32 %v668, %v670
    %v672 = vadd.f32 %v668, %v671
    %vm673 = vweird.f32 %v667
    %vm674 = vweird.f32 %v668
    %vm675 = vmor %vm673, %vm674
    %v676 = vsel %vm675, %v668, %v672
    %v677 = vand.u32 2147483647, %v667
    %vm678 = vcmp.eq.f32.partialorder %v677, 8.507059e+37
    %v679 = vand.u32 %v667, 2147483648
    %v680 = vor.u32 1.1754944e-38, %v679
    %v681 = vsel %vm678, %v680, %v676
    %v682 = vmul.f32 1.0, %v681
    %684 = vrot.lane.b32.xlu0 %v662, 64
    %v685 = vpop.permute.xlu0 %684
    %v687 = vmul.f32 %v682, %v685
    %689 = vrot.lane.b32.xlu0 %v687, 64
    %v690 = vpop.permute.xlu0 %689
    %v692 = vadd.f32 %v660, %v690
    %v693 = vtanh.pop %v692
    %v694 = vsub.f32 1.0, %v682
    %696 = vrot.lane.b32.xlu0 %v693, 96
    %v697 = vpop.permute.xlu0 %696
    %v699 = vmul.f32 %v694, %v697
    %v700 = vmul.f32 %v682, %v623
    %v701 = vadd.f32 %v699, %v700
    %703 = vrot.lane.b32.xlu0 %v701, 96
    %v704 = vpop.permute.xlu0 %703
    %v705 = vsel %vm98, %v704, 0
    %707 = vmatpush.msra.mxu0 0.0
    %708 = vmatpush.msra.mxu0 0.0
    %709 = vmatpush.msra.mxu0 0.0
    %710 = vmatpush.msra.mxu0 0.0
    %711 = vmatpush.msra.mxu0 0.0
    %712 = vmatpush.msra.mxu0 0.0
    %713 = vmatpush.msra.mxu0 0.0
    %714 = vmatpush.msra.mxu0 0.0
    %715 = vmatpush.msra.mxu0 0.0
    %716 = vmatpush.msra.mxu0 0.0
    %717 = vmatpush.msra.mxu0 0.0
    %718 = vmatpush.msra.mxu0 0.0
    %719 = vmatpush.msra.mxu0 %v277
    %720 = vmatpush.msra.mxu0 %v276
    %721 = vmatpush.msra.mxu0 %v275
    %722 = vmatpush.msra.mxu0 %v274
    %723 = vmatmul.f32.gmra.mxu0 %v705
    %v724 = vpop.f32.mrf.mxu0
    %v725 = vadd.f32 %v299, %v724
    %726 = vdwg.mxu0
    %v727 = vperm.slane %v81, 3
    %v728 = vadd.f32 %v725, %v727
    %v729 = vperm.slane %v81, 4
    %731 = vrot.lane.b32.xlu0 %v729, 8
    %v732 = vpop.permute.xlu0 %731
    %v734 = vadd.f32 %v725, %v732
    %v735 = vmax.f32 %v734, 0.0
    %vm736 = vcmp.ne.f32.partialorder %v734, %v734
    %v737 = vadd.f32 %v734, 0.0
    %v738 = vand.u32 2147483647, %v734
    %v739 = vsub.f32 0.0, %v738
    %v740 = vmul.f32 %v739, 1.442695
    %v741 = vpow.pop %v740
    %v742 = vadd.f32 %v741, 1.0
    %v743 = vlog2.pop %v742
    %v744 = vmul.f32 %v743, 0.6931472
    %v745 = vmul.f32 -0.5, %v741
    %v746 = vadd.f32 %v745, 1.0
    %v747 = vmul.f32 %v746, %v741
    %v748 = vand.u32 2147483647, %v741
    %vm749 = vcmp.lt.f32.partialorder %v748, 0.0004427343
    %v750 = vsel %vm749, %v747, %v744
    %v751 = vadd.f32 %v735, %v750
    %v752 = vsel %vm736, %v737, %v751
    %v753 = vmul.f32 %v752, 0.5
    %v754 = vmul.f32 %v753, 1.442695
    %v755 = vpow.pop %v754
    %s756 = scalar_lea.vmem [#allocation8], 32
    %v757 = vld [vmem:[%s756] sm:$0xff]
    %759 = vrot.lane.b32.xlu0 %v757, 8
    %v760 = vpop.permute.xlu0 %759
    %v762 = vmul.f32 %v755, %v760
    %764 = vrot.lane.b32.xlu0 %v762, 120
    %v765 = vpop.permute.xlu0 %764
    %v767 = vadd.f32 %v728, %v765
    %v768 = vlaneseq
    %v769 = vand.u32 %v768, 127
    %vm770 = vcmp.eq.s32.totalorder %v769, 0
    %v771 = vsel %vm770, 1, 0
    %v772 = vcvt.s32.f32 %v771
    %774 = vset.pattern.permute.xlu0 0
    %775 = vperm.xlu0 %774, %v310
    %v776 = vpop.permute.xlu0 %775
    %v778 = vmul.f32 %v776, %v772
    %vm779 = vcmp.eq.s32.totalorder %v769, 1
    %v780 = vsel %vm779, 1, 0
    %v781 = vcvt.s32.f32 %v780
    %783 = vset.pattern.permute.xlu0 0
    %784 = vperm.xlu0 %783, %v427
    %v785 = vpop.permute.xlu0 %784
    %v787 = vmul.f32 %v785, %v781
    %v788 = vadd.f32 %v778, %v787
    %vm789 = vcmp.eq.s32.totalorder %v769, 2
    %v790 = vsel %vm789, 1, 0
    %v791 = vcvt.s32.f32 %v790
    %793 = vset.pattern.permute.xlu0 0
    %794 = vperm.xlu0 %793, %v538
    %v795 = vpop.permute.xlu0 %794
    %v797 = vmul.f32 %v795, %v791
    %v798 = vadd.f32 %v788, %v797
    %vm799 = vcmp.eq.s32.totalorder %v769, 3
    %v800 = vsel %vm799, 1, 0
    %v801 = vcvt.s32.f32 %v800
    %803 = vset.pattern.permute.xlu0 0
    %804 = vperm.xlu0 %803, %v645
    %v805 = vpop.permute.xlu0 %804
    %v807 = vmul.f32 %v805, %v801
    %v808 = vadd.f32 %v798, %v807
    %v809 = vxor.u32 %v808, 2147483648
    %v810 = vmul.f32 %v809, 1.442695
    %v811 = vpow.pop %v810
    %v812 = vadd.f32 %v811, 1.0
    %v813 = vrcp.pop %v812
    %v814 = vmul.f32 %v812, %v813
    %v815 = vsub.f32 1.0, %v814
    %v816 = vmul.f32 %v813, %v815
    %v817 = vadd.f32 %v813, %v816
    %vm818 = vweird.f32 %v812
    %vm819 = vweird.f32 %v813
    %vm820 = vmor %vm818, %vm819
    %v821 = vsel %vm820, %v813, %v817
    %v822 = vand.u32 2147483647, %v812
    %vm823 = vcmp.eq.f32.partialorder %v822, 8.507059e+37
    %v824 = vand.u32 %v812, 2147483648
    %v825 = vor.u32 1.1754944e-38, %v824
    %v826 = vsel %vm823, %v825, %v821
    %v827 = vmul.f32 1.0, %v826
    %829 = vrot.lane.b32.xlu0 %v728, 8
    %v830 = vpop.permute.xlu0 %829
    %833 = vrot.lane.b32.xlu0 %v752, 8
    %v834 = vpop.permute.xlu0 %833
    %837 = vrot.lane.b32.xlu0 %v827, 24
    %v838 = vpop.permute.xlu0 %837
    %vm840 = vcmask 64512
    %v841 = vsel %vm840, %v767, %v830
    %vm842 = vcmask 130048
    %v843 = vsel %vm842, %v841, %v834
    %vm844 = vcmask 195584
    %v845 = vsel %vm844, %v843, %v838
    %vm846 = vcmask 228352
    %v847 = vsel %vm846, %v845, 0.0
    %848 = vst [vmem:[#allocation10] sm:$0xff] %v847
    // Predicated region
    $region34: #{tpu_custom_call.1} parent=1 // pred_check
      _
    $region35: #{tpu_custom_call.1} parent=1 // pred_check_branch
      %850 = sbr.rel (0) target = $region37
    $region36: #{tpu_custom_call.1} parent=1 // pred_region
      %852 = vsyncadd [#allocation4], 0
      %s854 = sshll.u32 [#allocation10], 4
      %s855 = int_to_ptr.vmem [resolvable:$true] %s854
      %s856 = sshll.u32 %s4, 4
      %s857 = int_to_ptr.hbm [resolvable:$true] %s856
      %859 = dma.vmem_to_hbm [thread:$0]  %s855, 128, %s857, [#allocation4]
    $region37: #{tpu_custom_call.1} parent=1 // pred_fallthru
      _
    // Predicated region
    $region38: #{tpu_custom_call.1} parent=1 // pred_check
      _
    $region39: #{tpu_custom_call.1} parent=1 // pred_check_branch
      %861 = sbr.rel (0) target = $region41
    $region40: #{tpu_custom_call.1} parent=1 // pred_region
      %863 = dma.done [#allocation4], 128
    $region41: #{tpu_custom_call.1} parent=1 // pred_fallthru
      _
    %864 = vsyncpa [#allocation3], 1
    %865 = vsyncpa [#allocation6], 1
    %866 = vsyncpa [#allocation9], 1
    %867 = vsyncpa [#allocation4], 1

</llo_original>
